<compile_context>
chip_gen: v7x
topology: tpu7x:2x2x1
jax: 0.10.0
libtpu: 0.0.40
codegen_flags: <defaults>
</compile_context>

<pallas_src>
import functools
import math

import jax
import jax.numpy as jnp
from jax import lax
from jax.experimental import pallas as pl
from jax.experimental.pallas import tpu as pltpu

EPS = 1e-5
# dim_per_head is hard-coded to 64 in the PyTorch module, so the softmax scale
# is ALWAYS 64**-0.5 regardless of C // num_heads.  Do not "fix" this.
ATTN_SCALE = 64.0 ** (-0.5)

_HAS_BUFFERED = hasattr(pl, "Buffered")


def _single_buffered_spec(block_shape, index_map):
    """BlockSpec requesting 1-deep buffering (no wasted second buffer for
    blocks that never change); falls back to a plain BlockSpec if this JAX
    version has no pipeline_mode."""
    if _HAS_BUFFERED:
        try:
            return pl.BlockSpec(block_shape, index_map,
                                pipeline_mode=pl.Buffered(1))
        except TypeError:
            pass
    return pl.BlockSpec(block_shape, index_map)


def _const_index_map(ndim):
    return lambda b, q: (0,) * ndim


def _layernorm(x, gamma, beta):
    mu = jnp.mean(x, axis=-1, keepdims=True)
    var = jnp.mean((x - mu) ** 2, axis=-1, keepdims=True)
    return (x - mu) * lax.rsqrt(var + EPS) * gamma + beta


def _gelu_exact(x):
    # TODO(synk): compute in bf16 on v6e/v7x (bf16 EUP ~2x erf throughput);
    # must stay f32 on v5e (no bf16 EUP).
    return 0.5 * x * (1.0 + lax.erf(x / math.sqrt(2.0)))


def transformer_block_kernel(
    xq_ref,                       # (1, TQ, C) query tile of x
    *rest,
    num_heads, heads_per_group, mlp_chunk, has_xf,
):
    if has_xf:
        xf_ref, *rest = rest      # (1, N, C) full sequence of x (same array)
    else:
        xf_ref = xq_ref           # single q-tile: the tile IS the full sequence
    (g0_ref, b0_ref,              # (1, C) f32
     wq_ref, wk_ref, wv_ref,      # (C, C) bf16 input-major; scale folded in wq
     wproj_ref, bproj_ref,        # (C, C) bf16 input-major, (1, C) f32
     g1_ref, b1_ref,              # (1, C) f32
     w1_ref, bm1_ref,             # (C, M) bf16, (1, M) f32
     w2_ref, bm2_ref,             # (M, C) bf16, (1, C) f32
     o_ref,                       # (1, TQ, C)
     k_sc, v_sc,                  # (N, C) bf16 scratch: K / V, full sequence
     attn_sc) = rest              # (TQ, C) bf16 scratch: packed head outputs

    c = xq_ref.shape[2]
    dh = c // num_heads
    gw = heads_per_group * dh
    n_groups = num_heads // heads_per_group
    f32, bf16 = jnp.float32, jnp.bfloat16

    # ---- LayerNorm0 + Q projection for this query tile ----------------------
    xq = xq_ref[0].astype(f32)                                      # (TQ, C)
    yq = _layernorm(xq, g0_ref[...], b0_ref[...]).astype(bf16)
    # ATTN_SCALE (64**-0.5) is already folded into wq host-side.
    q = jnp.dot(yq, wq_ref[...], preferred_element_type=f32).astype(bf16)

    # ---- K / V for the whole sequence: computed once per batch element ------
    @pl.when(pl.program_id(1) == 0)
    def _compute_kv():
        if has_xf:
            xf = xf_ref[0].astype(f32)                              # (N, C)
            yf = _layernorm(xf, g0_ref[...], b0_ref[...]).astype(bf16)
        else:
            yf = yq                          # whole sequence == this q tile
        k_sc[...] = jnp.dot(yf, wk_ref[...],
                            preferred_element_type=f32).astype(bf16)
        v_sc[...] = jnp.dot(yf, wv_ref[...],
                            preferred_element_type=f32).astype(bf16)

    # ---- multi-head attention, heads packed into lane-dense groups ----------
    # K/V/Q are read and the group's P@V outputs stored in gw-lane slices
    # (128 lanes for dh=64 head pairs) so VMEM traffic is lane-dense (no
    # masked vst.msk partial stores, no half-lane relayout reads).
    # The QK^T contraction itself MUST stay per head.  The trans-B dot_general
    # dims below match the official Pallas flash-attention kernel and lower
    # natively on the MXU (no per-head vxpose).
    # TODO(synk): if bundle dumps show vreg spills at num_heads >= 12, switch
    # this static loop to lax.fori_loop over groups with pl.multiple_of'd
    # dynamic 128-lane offsets to bound live ranges.
    for g in range(n_groups):
        glo, ghi = g * gw, (g + 1) * gw
        qg = q[:, glo:ghi]                                          # (TQ, gw)
        kg = k_sc[:, glo:ghi]                                       # (N,  gw)
        vg = v_sc[:, glo:ghi]                                       # (N,  gw)
        outs = []
        for j in range(heads_per_group):
            lo, hi = j * dh, (j + 1) * dh
            s = lax.dot_general(qg[:, lo:hi], kg[:, lo:hi],
                                (((1,), (1,)), ((), ())),
                                preferred_element_type=f32)         # (TQ, N)
            s = s - jnp.max(s, axis=-1, keepdims=True)
            p = jnp.exp(s)
            p = p * pl.reciprocal(jnp.sum(p, axis=-1, keepdims=True),
                                  approx=True)
            outs.append(jnp.dot(p.astype(bf16), vg[:, lo:hi],
                                preferred_element_type=f32))        # (TQ, dh)
        og = outs[0] if len(outs) == 1 else jnp.concatenate(outs, axis=-1)
        attn_sc[:, glo:ghi] = og.astype(bf16)   # one lane-dense store / group

    # ---- output projection + residual ----------------------------------------
    proj = jnp.dot(attn_sc[...], wproj_ref[...],
                   preferred_element_type=f32) + bproj_ref[...]
    y1 = proj + xq                                                  # (TQ, C)

    # ---- LayerNorm1 + MLP (hidden dim chunked) + residual --------------------
    z = _layernorm(y1, g1_ref[...], b1_ref[...]).astype(bf16)
    m_total = w1_ref.shape[1]
    acc = y1 + bm2_ref[...]              # residual + W2 bias folded into init
    for clo in range(0, m_total, mlp_chunk):
        chi = clo + mlp_chunk
        h = jnp.dot(z, w1_ref[:, clo:chi],
                    preferred_element_type=f32) + bm1_ref[:, clo:chi]
        h = _gelu_exact(h)               # (TQ, mlp_chunk) f32
        acc = acc + jnp.dot(h.astype(bf16), w2_ref[clo:chi, :],
                            preferred_element_type=f32)
    o_ref[0] = acc.astype(o_ref.dtype)


def transformer_block(x, params, num_heads, *, seq_tile=256, mlp_chunk=512):
    """x: (B, N, C) float32.  params: kernel-layout weights (see prepare_params)."""
    B, N, C = x.shape
    assert C % num_heads == 0
    dh = C // num_heads
    tq = N if N <= seq_tile else seq_tile
    # TODO(synk): real ViT sequence lengths (e.g. 197 tokens) need padding to a
    # tile multiple plus score masking; not implemented here.
    assert N % tq == 0, "sequence length must be divisible by the query tile"
    nq = N // tq
    has_xf = nq > 1      # ship the full sequence only if it is actually needed

    # Lane-dense head grouping: pack as many dh-wide heads as fit in 128 lanes
    # (e.g. 2 heads of dh=64) per K/V/attn-out slice.
    hpg = min(num_heads, max(1, 128 // dh)) if dh < 128 else 1
    while num_heads % hpg:
        hpg -= 1

    M = params["w1"].shape[1]
    mchunk = mlp_chunk if (M > mlp_chunk and M % mlp_chunk == 0) else M

    weights = [
        params["g0"], params["b0"],
        params["wq"], params["wk"], params["wv"],
        params["wproj"], params["bproj"],
        params["g1"], params["b1"],
        params["w1"], params["bm1"],
        params["w2"], params["bm2"],
    ]

    # Weights are VMEM-resident (constant index map) -> single-buffered: the
    # default 2-deep pipeline would double their footprint for nothing
    # (existential on v7x's 64 MiB/TC for ViT-B/L sized weights).
    in_specs = [pl.BlockSpec((1, tq, C), lambda b, q: (b, q, 0))]
    if has_xf:
        # Full sequence, consumed only at q-tile 0 -> single buffer too.
        in_specs.append(_single_buffered_spec((1, N, C), lambda b, q: (b, 0, 0)))
    in_specs += [_single_buffered_spec(w.shape, _const_index_map(w.ndim))
                 for w in weights]
    out_specs = pl.BlockSpec((1, tq, C), lambda b, q: (b, q, 0))

    # VMEM budget derived from the actual buffers (+ headroom for f32 temps and
    # spills) instead of a hard-coded constant; clamped below physical VMEM of
    # any generation (64 MiB/TC on v7x).
    isz = x.dtype.itemsize
    weight_bytes = sum(int(w.size) * w.dtype.itemsize for w in weights)
    io_bytes = 4 * tq * C * isz + (N * C * isz if has_xf else 0)
    scratch_bytes = (2 * N * C + tq * C) * 2
    temp_bytes = 4 * tq * (3 * N + 2 * mchunk + 8 * C) + (4 << 20)
    vmem_limit = int(min(max(weight_bytes + io_bytes + scratch_bytes
                             + temp_bytes, 32 << 20), 96 << 20))

    kernel = functools.partial(
        transformer_block_kernel, num_heads=num_heads, heads_per_group=hpg,
        mlp_chunk=mchunk, has_xf=has_xf)

    call = pl.pallas_call(
        kernel,
        out_shape=jax.ShapeDtypeStruct((B, N, C), x.dtype),
        grid=(B, nq),
        in_specs=in_specs,
        out_specs=out_specs,
        scratch_shapes=[
            pltpu.VMEM((N, C), jnp.bfloat16),    # K, full sequence
            pltpu.VMEM((N, C), jnp.bfloat16),    # V, full sequence
            pltpu.VMEM((tq, C), jnp.bfloat16),   # packed per-head attn output
        ],
        compiler_params=pltpu.CompilerParams(
            # Batch axis feeds megacore; the q-tile axis carries the per-batch
            # K/V scratch so it must stay "arbitrary".
            # TODO(synk): hoist the K/V projection into its own grid phase /
            # pallas_call so the q axis can be "parallel" too (keeps v7x's
            # second TensorCore busy at batch=1).
            dimension_semantics=("parallel", "arbitrary"),
            vmem_limit_bytes=vmem_limit,
        ),
    )
    args = (x, x, *weights) if has_xf else (x, *weights)
    return call(*args)


def init_params_torch_layout(key, feature_dim, mlp_dim):
    """Random parameters in the PyTorch nn.Module layout ((out_features, in_features))."""
    ks = jax.random.split(key, 7)
    s = 0.02
    C, M = feature_dim, mlp_dim
    return {
        "ln0_gamma": jnp.ones((C,), jnp.float32),
        "ln0_beta": jnp.zeros((C,), jnp.float32),
        "to_qkv_w": (jax.random.normal(ks[0], (3 * C, C)) * s).astype(jnp.float32),
        "proj_w": (jax.random.normal(ks[1], (C, C)) * s).astype(jnp.float32),
        "proj_b": (jax.random.normal(ks[2], (C,)) * s).astype(jnp.float32),
        "ln1_gamma": jnp.ones((C,), jnp.float32),
        "ln1_beta": jnp.zeros((C,), jnp.float32),
        "mlp_w1": (jax.random.normal(ks[3], (M, C)) * s).astype(jnp.float32),
        "mlp_b1": (jax.random.normal(ks[4], (M,)) * s).astype(jnp.float32),
        "mlp_w2": (jax.random.normal(ks[5], (C, M)) * s).astype(jnp.float32),
        "mlp_b2": (jax.random.normal(ks[6], (C,)) * s).astype(jnp.float32),
    }


def prepare_params(p):
    """One-time host-side re-layout: transpose to input-major, split qkv into
    q/k/v, fold the attention scale into wq, cast matmul weights to bf16
    (f32 accumulation inside the kernel)."""
    C = p["proj_w"].shape[0]
    wqkv_t = p["to_qkv_w"].T            # (C, 3C): columns = [q | k | v]
    bf16 = jnp.bfloat16
    return {
        "g0": p["ln0_gamma"].reshape(1, C),
        "b0": p["ln0_beta"].reshape(1, C),
        # dim_per_head is hard-coded to 64 in the PyTorch module: the folded
        # scale is ALWAYS 64**-0.5, NOT (C // num_heads)**-0.5.
        "wq": (wqkv_t[:, 0 * C:1 * C] * ATTN_SCALE).astype(bf16),
        "wk": wqkv_t[:, 1 * C:2 * C].astype(bf16),
        "wv": wqkv_t[:, 2 * C:3 * C].astype(bf16),
        "wproj": p["proj_w"].T.astype(bf16),          # (C, C) input-major
        "bproj": p["proj_b"].reshape(1, C),
        "g1": p["ln1_gamma"].reshape(1, C),
        "b1": p["ln1_beta"].reshape(1, C),
        "w1": p["mlp_w1"].T.astype(bf16),             # (C, M)
        "bm1": p["mlp_b1"].reshape(1, -1),
        "w2": p["mlp_w2"].T.astype(bf16),             # (M, C)
        "bm2": p["mlp_b2"].reshape(1, C),
    }


def reference_forward(x, tp, num_heads):
    """Pure-JAX f32 reference implementing the PyTorch module (eval mode)."""
    B, N, C = x.shape
    H = num_heads
    dh = C // H

    def ln(v, g, b):
        mu = jnp.mean(v, axis=-1, keepdims=True)
        var = jnp.mean((v - mu) ** 2, axis=-1, keepdims=True)
        return (v - mu) / jnp.sqrt(var + EPS) * g + b

    y = ln(x, tp["ln0_gamma"], tp["ln0_beta"])
    qkv = y @ tp["to_qkv_w"].T                                    # (B, N, 3C)
    qkv = jnp.transpose(qkv.reshape(B, N, 3, H, dh), (2, 0, 3, 1, 4))
    q, k, v = qkv[0], qkv[1], qkv[2]                               # (B, H, N, dh)
    s = jnp.einsum("bhqd,bhkd->bhqk", q, k) * ATTN_SCALE
    p = jax.nn.softmax(s, axis=-1)
    o = jnp.einsum("bhqk,bhkd->bhqd", p, v)
    o = jnp.transpose(o, (0, 2, 1, 3)).reshape(B, N, C)
    o = o @ tp["proj_w"].T + tp["proj_b"]
    y1 = o + x
    z = ln(y1, tp["ln1_gamma"], tp["ln1_beta"])
    hdn = z @ tp["mlp_w1"].T + tp["mlp_b1"]
    hdn = 0.5 * hdn * (1.0 + lax.erf(hdn / math.sqrt(2.0)))
    z2 = hdn @ tp["mlp_w2"].T + tp["mlp_b2"]
    return z2 + y1


if __name__ == "__main__":
    def _run(B, N, C, H, M, seq_tile):
        key = jax.random.PRNGKey(0)
        kx, kp = jax.random.split(key)
        x = jax.random.normal(kx, (B, N, C), dtype=jnp.float32)
        torch_layout = init_params_torch_layout(kp, C, M)
        params = prepare_params(torch_layout)

        out = transformer_block(x, params, H, seq_tile=seq_tile)
        out = jax.block_until_ready(out)
        assert out.shape == (B, N, C)

        # Numerical check vs. the f32 pure-JAX reference (kernel uses bf16 MXU
        # operands + approx reciprocal, so a relaxed tolerance applies).
        ref = reference_forward(x, torch_layout, H)
        max_err = float(jnp.max(jnp.abs(out - ref)))
        assert max_err < 2e-2, f"max abs error too large: {max_err}"

    # Small config from the module spec: single query tile (x shipped once).
    _run(B=2, N=8, C=32, H=4, M=64, seq_tile=256)
    # Exercises the multi-q-tile path, dh=64 head pairs packed per 128-lane
    # group, and the chunked (2 x 512) MLP hidden dim.
    _run(B=1, N=256, C=128, H=2, M=1024, seq_tile=128)

    print("KERNEL_OK")
</pallas_src>

<mosaic_0001>
module attributes {stable_mosaic.version = 11 : i64} {
  func.func @transformer_block_kernel(%arg0: i32, %arg1: i32, %arg2: memref<1x8x32xf32, #tpu.memory_space<vmem>>, %arg3: memref<1x32xf32, #tpu.memory_space<vmem>>, %arg4: memref<1x32xf32, #tpu.memory_space<vmem>>, %arg5: memref<32x32xbf16, #tpu.memory_space<vmem>>, %arg6: memref<32x32xbf16, #tpu.memory_space<vmem>>, %arg7: memref<32x32xbf16, #tpu.memory_space<vmem>>, %arg8: memref<32x32xbf16, #tpu.memory_space<vmem>>, %arg9: memref<1x32xf32, #tpu.memory_space<vmem>>, %arg10: memref<1x32xf32, #tpu.memory_space<vmem>>, %arg11: memref<1x32xf32, #tpu.memory_space<vmem>>, %arg12: memref<32x64xbf16, #tpu.memory_space<vmem>>, %arg13: memref<1x64xf32, #tpu.memory_space<vmem>>, %arg14: memref<64x32xbf16, #tpu.memory_space<vmem>>, %arg15: memref<1x32xf32, #tpu.memory_space<vmem>>, %arg16: memref<1x8x32xf32, #tpu.memory_space<vmem>>, %arg17: memref<8x32xbf16, #tpu.memory_space<vmem>>, %arg18: memref<8x32xbf16, #tpu.memory_space<vmem>>, %arg19: memref<8x32xbf16, #tpu.memory_space<vmem>>) attributes {dimension_semantics = [#tpu.dimension_semantics<parallel>, #tpu.dimension_semantics<arbitrary>], iteration_bounds = array<i64: 2, 1>, scalar_prefetch = 0 : i64, scratch_operands = 3 : i64, tpu.core_type = #tpu.core_type<tc>, window_params = [{transform_indices = @transform_0, window_bounds = array<i64: 1, 8, 32>}, {pipeline_mode = #tpu.pipeline_mode<synchronous>, transform_indices = @transform_1, window_bounds = array<i64: 1, 32>}, {pipeline_mode = #tpu.pipeline_mode<synchronous>, transform_indices = @transform_2, window_bounds = array<i64: 1, 32>}, {pipeline_mode = #tpu.pipeline_mode<synchronous>, transform_indices = @transform_3, window_bounds = array<i64: 32, 32>}, {pipeline_mode = #tpu.pipeline_mode<synchronous>, transform_indices = @transform_4, window_bounds = array<i64: 32, 32>}, {pipeline_mode = #tpu.pipeline_mode<synchronous>, transform_indices = @transform_5, window_bounds = array<i64: 32, 32>}, {pipeline_mode = #tpu.pipeline_mode<synchronous>, transform_indices = @transform_6, window_bounds = array<i64: 32, 32>}, {pipeline_mode = #tpu.pipeline_mode<synchronous>, transform_indices = @transform_7, window_bounds = array<i64: 1, 32>}, {pipeline_mode = #tpu.pipeline_mode<synchronous>, transform_indices = @transform_8, window_bounds = array<i64: 1, 32>}, {pipeline_mode = #tpu.pipeline_mode<synchronous>, transform_indices = @transform_9, window_bounds = array<i64: 1, 32>}, {pipeline_mode = #tpu.pipeline_mode<synchronous>, transform_indices = @transform_10, window_bounds = array<i64: 32, 64>}, {pipeline_mode = #tpu.pipeline_mode<synchronous>, transform_indices = @transform_11, window_bounds = array<i64: 1, 64>}, {pipeline_mode = #tpu.pipeline_mode<synchronous>, transform_indices = @transform_12, window_bounds = array<i64: 64, 32>}, {pipeline_mode = #tpu.pipeline_mode<synchronous>, transform_indices = @transform_13, window_bounds = array<i64: 1, 32>}, {transform_indices = @transform_14, window_bounds = array<i64: 1, 8, 32>}]} {
    %c0 = arith.constant 0 : index
    %c0_0 = arith.constant 0 : index
    %c0_1 = arith.constant 0 : index
    %0 = vector.load %arg2[%c0, %c0_0, %c0_1] : memref<1x8x32xf32, #tpu.memory_space<vmem>>, vector<1x8x32xf32>
    %1 = vector.shape_cast %0 : vector<1x8x32xf32> to vector<8x32xf32>
    %c0_2 = arith.constant 0 : index
    %c0_3 = arith.constant 0 : index
    %2 = vector.load %arg3[%c0_2, %c0_3] : memref<1x32xf32, #tpu.memory_space<vmem>>, vector<1x32xf32>
    %c0_4 = arith.constant 0 : index
    %c0_5 = arith.constant 0 : index
    %3 = vector.load %arg4[%c0_4, %c0_5] : memref<1x32xf32, #tpu.memory_space<vmem>>, vector<1x32xf32>
    %cst = arith.constant dense<0.000000e+00> : vector<8xf32>
    %4 = vector.multi_reduction <add>, %1, %cst [1] : vector<8x32xf32> to vector<8xf32>
    %5 = vector.shape_cast %4 : vector<8xf32> to vector<8x1xf32>
    %cst_6 = arith.constant 3.200000e+01 : f32
    %6 = vector.broadcast %cst_6 : f32 to vector<8x1xf32>
    %7 = arith.divf %5, %6 : vector<8x1xf32>
    %8 = vector.broadcast %7 : vector<8x1xf32> to vector<8x32xf32>
    %9 = arith.subf %1, %8 : vector<8x32xf32>
    %10 = arith.mulf %9, %9 : vector<8x32xf32>
    %cst_7 = arith.constant dense<0.000000e+00> : vector<8xf32>
    %11 = vector.multi_reduction <add>, %10, %cst_7 [1] : vector<8x32xf32> to vector<8xf32>
    %12 = vector.shape_cast %11 : vector<8xf32> to vector<8x1xf32>
    %cst_8 = arith.constant 3.200000e+01 : f32
    %13 = vector.broadcast %cst_8 : f32 to vector<8x1xf32>
    %14 = arith.divf %12, %13 : vector<8x1xf32>
    %15 = vector.broadcast %7 : vector<8x1xf32> to vector<8x32xf32>
    %16 = arith.subf %1, %15 : vector<8x32xf32>
    %cst_9 = arith.constant 9.99999974E-6 : f32
    %17 = vector.broadcast %cst_9 : f32 to vector<8x1xf32>
    %18 = arith.addf %14, %17 : vector<8x1xf32>
    %19 = math.rsqrt %18 : vector<8x1xf32>
    %20 = vector.broadcast %19 : vector<8x1xf32> to vector<8x32xf32>
    %21 = arith.mulf %16, %20 : vector<8x32xf32>
    %22 = vector.broadcast %2 : vector<1x32xf32> to vector<8x32xf32>
    %23 = arith.mulf %21, %22 : vector<8x32xf32>
    %24 = vector.broadcast %3 : vector<1x32xf32> to vector<8x32xf32>
    %25 = arith.addf %23, %24 : vector<8x32xf32>
    %26 = arith.truncf %25 : vector<8x32xf32> to vector<8x32xbf16>
    %c0_10 = arith.constant 0 : index
    %c0_11 = arith.constant 0 : index
    %27 = vector.load %arg5[%c0_10, %c0_11] : memref<32x32xbf16, #tpu.memory_space<vmem>>, vector<32x32xbf16>
    %cst_12 = arith.constant dense<0.000000e+00> : vector<8x32xf32>
    %28 = tpu.matmul %26, %27, %cst_12 {dimension_numbers = #tpu.dot_dimension_numbers<[1], [0], [0], [1], [0, 0, 1, 1], [], []>} : vector<8x32xbf16>, vector<32x32xbf16>, vector<8x32xf32> -> vector<8x32xf32>
    %29 = arith.truncf %28 : vector<8x32xf32> to vector<8x32xbf16>
    %c0_i32 = arith.constant 0 : i32
    %30 = arith.cmpi eq, %arg1, %c0_i32 : i32
    %31 = arith.extui %30 : i1 to i32
    %c0_i32_13 = arith.constant 0 : i32
    %32 = arith.cmpi ne, %31, %c0_i32_13 : i32
    scf.if %32 {
      %c0_68 = arith.constant 0 : index
      %c0_69 = arith.constant 0 : index
      %157 = vector.load %arg6[%c0_68, %c0_69] : memref<32x32xbf16, #tpu.memory_space<vmem>>, vector<32x32xbf16>
      %cst_70 = arith.constant dense<0.000000e+00> : vector<8x32xf32>
      %158 = tpu.matmul %26, %157, %cst_70 {dimension_numbers = #tpu.dot_dimension_numbers<[1], [0], [0], [1], [0, 0, 1, 1], [], []>} : vector<8x32xbf16>, vector<32x32xbf16>, vector<8x32xf32> -> vector<8x32xf32>
      %159 = arith.truncf %158 : vector<8x32xf32> to vector<8x32xbf16>
      %c0_71 = arith.constant 0 : index
      %c0_72 = arith.constant 0 : index
      %160 = vector.load %arg17[%c0_71, %c0_72] : memref<8x32xbf16, #tpu.memory_space<vmem>>, vector<8x32xbf16>
      tpu.vector_store %arg17[%c0_71, %c0_72], %159 {strides = array<i32>} : memref<8x32xbf16, #tpu.memory_space<vmem>>, vector<8x32xbf16>,
      %c0_73 = arith.constant 0 : index
      %c0_74 = arith.constant 0 : index
      %161 = vector.load %arg7[%c0_73, %c0_74] : memref<32x32xbf16, #tpu.memory_space<vmem>>, vector<32x32xbf16>
      %cst_75 = arith.constant dense<0.000000e+00> : vector<8x32xf32>
      %162 = tpu.matmul %26, %161, %cst_75 {dimension_numbers = #tpu.dot_dimension_numbers<[1], [0], [0], [1], [0, 0, 1, 1], [], []>} : vector<8x32xbf16>, vector<32x32xbf16>, vector<8x32xf32> -> vector<8x32xf32>
      %163 = arith.truncf %162 : vector<8x32xf32> to vector<8x32xbf16>
      %c0_76 = arith.constant 0 : index
      %c0_77 = arith.constant 0 : index
      %164 = vector.load %arg18[%c0_76, %c0_77] : memref<8x32xbf16, #tpu.memory_space<vmem>>, vector<8x32xbf16>
      tpu.vector_store %arg18[%c0_76, %c0_77], %163 {strides = array<i32>} : memref<8x32xbf16, #tpu.memory_space<vmem>>, vector<8x32xbf16>,
    } else {
    }
    %c0_14 = arith.constant 0 : index
    %c0_15 = arith.constant 0 : index
    %33 = vector.load %arg17[%c0_14, %c0_15] : memref<8x32xbf16, #tpu.memory_space<vmem>>, vector<8x32xbf16>
    %c0_16 = arith.constant 0 : index
    %c0_17 = arith.constant 0 : index
    %34 = vector.load %arg18[%c0_16, %c0_17] : memref<8x32xbf16, #tpu.memory_space<vmem>>, vector<8x32xbf16>
    %35 = vector.extract_strided_slice %29 {offsets = [0, 0], sizes = [8, 8], strides = [1, 1]} : vector<8x32xbf16> to vector<8x8xbf16>
    %36 = vector.extract_strided_slice %33 {offsets = [0, 0], sizes = [8, 8], strides = [1, 1]} : vector<8x32xbf16> to vector<8x8xbf16>
    %cst_18 = arith.constant dense<0.000000e+00> : vector<8x8xf32>
    %37 = tpu.matmul %35, %36, %cst_18 {dimension_numbers = #tpu.dot_dimension_numbers<[1], [1], [0], [0], [0, 0, 1, 0], [], []>} : vector<8x8xbf16>, vector<8x8xbf16>, vector<8x8xf32> -> vector<8x8xf32>
    %cst_19 = arith.constant dense<0xFF800000> : vector<8xf32>
    %38 = vector.multi_reduction <maximumf>, %37, %cst_19 [1] : vector<8x8xf32> to vector<8xf32>
    %39 = vector.shape_cast %38 : vector<8xf32> to vector<8x1xf32>
    %40 = vector.broadcast %39 : vector<8x1xf32> to vector<8x8xf32>
    %41 = arith.subf %37, %40 : vector<8x8xf32>
    %42 = math.exp %41 : vector<8x8xf32>
    %cst_20 = arith.constant dense<0.000000e+00> : vector<8xf32>
    %43 = vector.multi_reduction <add>, %42, %cst_20 [1] : vector<8x8xf32> to vector<8xf32>
    %44 = vector.shape_cast %43 : vector<8xf32> to vector<8x1xf32>
    %45 = tpu.reciprocal %44 {approx = true} : vector<8x1xf32> -> vector<8x1xf32>
    %46 = vector.broadcast %45 : vector<8x1xf32> to vector<8x8xf32>
    %47 = arith.mulf %42, %46 : vector<8x8xf32>
    %48 = arith.truncf %47 : vector<8x8xf32> to vector<8x8xbf16>
    %49 = vector.extract_strided_slice %34 {offsets = [0, 0], sizes = [8, 8], strides = [1, 1]} : vector<8x32xbf16> to vector<8x8xbf16>
    %cst_21 = arith.constant dense<0.000000e+00> : vector<8x8xf32>
    %50 = tpu.matmul %48, %49, %cst_21 {dimension_numbers = #tpu.dot_dimension_numbers<[1], [0], [0], [1], [0, 0, 1, 1], [], []>} : vector<8x8xbf16>, vector<8x8xbf16>, vector<8x8xf32> -> vector<8x8xf32>
    %51 = vector.extract_strided_slice %29 {offsets = [0, 8], sizes = [8, 8], strides = [1, 1]} : vector<8x32xbf16> to vector<8x8xbf16>
    %52 = vector.extract_strided_slice %33 {offsets = [0, 8], sizes = [8, 8], strides = [1, 1]} : vector<8x32xbf16> to vector<8x8xbf16>
    %cst_22 = arith.constant dense<0.000000e+00> : vector<8x8xf32>
    %53 = tpu.matmul %51, %52, %cst_22 {dimension_numbers = #tpu.dot_dimension_numbers<[1], [1], [0], [0], [0, 0, 1, 0], [], []>} : vector<8x8xbf16>, vector<8x8xbf16>, vector<8x8xf32> -> vector<8x8xf32>
    %cst_23 = arith.constant dense<0xFF800000> : vector<8xf32>
    %54 = vector.multi_reduction <maximumf>, %53, %cst_23 [1] : vector<8x8xf32> to vector<8xf32>
    %55 = vector.shape_cast %54 : vector<8xf32> to vector<8x1xf32>
    %56 = vector.broadcast %55 : vector<8x1xf32> to vector<8x8xf32>
    %57 = arith.subf %53, %56 : vector<8x8xf32>
    %58 = math.exp %57 : vector<8x8xf32>
    %cst_24 = arith.constant dense<0.000000e+00> : vector<8xf32>
    %59 = vector.multi_reduction <add>, %58, %cst_24 [1] : vector<8x8xf32> to vector<8xf32>
    %60 = vector.shape_cast %59 : vector<8xf32> to vector<8x1xf32>
    %61 = tpu.reciprocal %60 {approx = true} : vector<8x1xf32> -> vector<8x1xf32>
    %62 = vector.broadcast %61 : vector<8x1xf32> to vector<8x8xf32>
    %63 = arith.mulf %58, %62 : vector<8x8xf32>
    %64 = arith.truncf %63 : vector<8x8xf32> to vector<8x8xbf16>
    %65 = vector.extract_strided_slice %34 {offsets = [0, 8], sizes = [8, 8], strides = [1, 1]} : vector<8x32xbf16> to vector<8x8xbf16>
    %cst_25 = arith.constant dense<0.000000e+00> : vector<8x8xf32>
    %66 = tpu.matmul %64, %65, %cst_25 {dimension_numbers = #tpu.dot_dimension_numbers<[1], [0], [0], [1], [0, 0, 1, 1], [], []>} : vector<8x8xbf16>, vector<8x8xbf16>, vector<8x8xf32> -> vector<8x8xf32>
    %67 = vector.extract_strided_slice %29 {offsets = [0, 16], sizes = [8, 8], strides = [1, 1]} : vector<8x32xbf16> to vector<8x8xbf16>
    %68 = vector.extract_strided_slice %33 {offsets = [0, 16], sizes = [8, 8], strides = [1, 1]} : vector<8x32xbf16> to vector<8x8xbf16>
    %cst_26 = arith.constant dense<0.000000e+00> : vector<8x8xf32>
    %69 = tpu.matmul %67, %68, %cst_26 {dimension_numbers = #tpu.dot_dimension_numbers<[1], [1], [0], [0], [0, 0, 1, 0], [], []>} : vector<8x8xbf16>, vector<8x8xbf16>, vector<8x8xf32> -> vector<8x8xf32>
    %cst_27 = arith.constant dense<0xFF800000> : vector<8xf32>
    %70 = vector.multi_reduction <maximumf>, %69, %cst_27 [1] : vector<8x8xf32> to vector<8xf32>
    %71 = vector.shape_cast %70 : vector<8xf32> to vector<8x1xf32>
    %72 = vector.broadcast %71 : vector<8x1xf32> to vector<8x8xf32>
    %73 = arith.subf %69, %72 : vector<8x8xf32>
    %74 = math.exp %73 : vector<8x8xf32>
    %cst_28 = arith.constant dense<0.000000e+00> : vector<8xf32>
    %75 = vector.multi_reduction <add>, %74, %cst_28 [1] : vector<8x8xf32> to vector<8xf32>
    %76 = vector.shape_cast %75 : vector<8xf32> to vector<8x1xf32>
    %77 = tpu.reciprocal %76 {approx = true} : vector<8x1xf32> -> vector<8x1xf32>
    %78 = vector.broadcast %77 : vector<8x1xf32> to vector<8x8xf32>
    %79 = arith.mulf %74, %78 : vector<8x8xf32>
    %80 = arith.truncf %79 : vector<8x8xf32> to vector<8x8xbf16>
    %81 = vector.extract_strided_slice %34 {offsets = [0, 16], sizes = [8, 8], strides = [1, 1]} : vector<8x32xbf16> to vector<8x8xbf16>
    %cst_29 = arith.constant dense<0.000000e+00> : vector<8x8xf32>
    %82 = tpu.matmul %80, %81, %cst_29 {dimension_numbers = #tpu.dot_dimension_numbers<[1], [0], [0], [1], [0, 0, 1, 1], [], []>} : vector<8x8xbf16>, vector<8x8xbf16>, vector<8x8xf32> -> vector<8x8xf32>
    %83 = vector.extract_strided_slice %29 {offsets = [0, 24], sizes = [8, 8], strides = [1, 1]} : vector<8x32xbf16> to vector<8x8xbf16>
    %84 = vector.extract_strided_slice %33 {offsets = [0, 24], sizes = [8, 8], strides = [1, 1]} : vector<8x32xbf16> to vector<8x8xbf16>
    %cst_30 = arith.constant dense<0.000000e+00> : vector<8x8xf32>
    %85 = tpu.matmul %83, %84, %cst_30 {dimension_numbers = #tpu.dot_dimension_numbers<[1], [1], [0], [0], [0, 0, 1, 0], [], []>} : vector<8x8xbf16>, vector<8x8xbf16>, vector<8x8xf32> -> vector<8x8xf32>
    %cst_31 = arith.constant dense<0xFF800000> : vector<8xf32>
    %86 = vector.multi_reduction <maximumf>, %85, %cst_31 [1] : vector<8x8xf32> to vector<8xf32>
    %87 = vector.shape_cast %86 : vector<8xf32> to vector<8x1xf32>
    %88 = vector.broadcast %87 : vector<8x1xf32> to vector<8x8xf32>
    %89 = arith.subf %85, %88 : vector<8x8xf32>
    %90 = math.exp %89 : vector<8x8xf32>
    %cst_32 = arith.constant dense<0.000000e+00> : vector<8xf32>
    %91 = vector.multi_reduction <add>, %90, %cst_32 [1] : vector<8x8xf32> to vector<8xf32>
    %92 = vector.shape_cast %91 : vector<8xf32> to vector<8x1xf32>
    %93 = tpu.reciprocal %92 {approx = true} : vector<8x1xf32> -> vector<8x1xf32>
    %94 = vector.broadcast %93 : vector<8x1xf32> to vector<8x8xf32>
    %95 = arith.mulf %90, %94 : vector<8x8xf32>
    %96 = arith.truncf %95 : vector<8x8xf32> to vector<8x8xbf16>
    %97 = vector.extract_strided_slice %34 {offsets = [0, 24], sizes = [8, 8], strides = [1, 1]} : vector<8x32xbf16> to vector<8x8xbf16>
    %cst_33 = arith.constant dense<0.000000e+00> : vector<8x8xf32>
    %98 = tpu.matmul %96, %97, %cst_33 {dimension_numbers = #tpu.dot_dimension_numbers<[1], [0], [0], [1], [0, 0, 1, 1], [], []>} : vector<8x8xbf16>, vector<8x8xbf16>, vector<8x8xf32> -> vector<8x8xf32>
    %99 = tpu.concatenate %50, %66, %82, %98 in 1 : vector<8x8xf32>, vector<8x8xf32>, vector<8x8xf32>, vector<8x8xf32> -> vector<8x32xf32>
    %100 = arith.truncf %99 : vector<8x32xf32> to vector<8x32xbf16>
    %c0_34 = arith.constant 0 : index
    %c0_35 = arith.constant 0 : index
    %101 = vector.load %arg19[%c0_34, %c0_35] : memref<8x32xbf16, #tpu.memory_space<vmem>>, vector<8x32xbf16>
    tpu.vector_store %arg19[%c0_34, %c0_35], %100 {strides = array<i32>} : memref<8x32xbf16, #tpu.memory_space<vmem>>, vector<8x32xbf16>,
    %c0_36 = arith.constant 0 : index
    %c0_37 = arith.constant 0 : index
    %102 = vector.load %arg19[%c0_36, %c0_37] : memref<8x32xbf16, #tpu.memory_space<vmem>>, vector<8x32xbf16>
    %c0_38 = arith.constant 0 : index
    %c0_39 = arith.constant 0 : index
    %103 = vector.load %arg8[%c0_38, %c0_39] : memref<32x32xbf16, #tpu.memory_space<vmem>>, vector<32x32xbf16>
    %cst_40 = arith.constant dense<0.000000e+00> : vector<8x32xf32>
    %104 = tpu.matmul %102, %103, %cst_40 {dimension_numbers = #tpu.dot_dimension_numbers<[1], [0], [0], [1], [0, 0, 1, 1], [], []>} : vector<8x32xbf16>, vector<32x32xbf16>, vector<8x32xf32> -> vector<8x32xf32>
    %c0_41 = arith.constant 0 : index
    %c0_42 = arith.constant 0 : index
    %105 = vector.load %arg9[%c0_41, %c0_42] : memref<1x32xf32, #tpu.memory_space<vmem>>, vector<1x32xf32>
    %106 = vector.broadcast %105 : vector<1x32xf32> to vector<8x32xf32>
    %107 = arith.addf %104, %106 : vector<8x32xf32>
    %108 = arith.addf %107, %1 : vector<8x32xf32>
    %c0_43 = arith.constant 0 : index
    %c0_44 = arith.constant 0 : index
    %109 = vector.load %arg10[%c0_43, %c0_44] : memref<1x32xf32, #tpu.memory_space<vmem>>, vector<1x32xf32>
    %c0_45 = arith.constant 0 : index
    %c0_46 = arith.constant 0 : index
    %110 = vector.load %arg11[%c0_45, %c0_46] : memref<1x32xf32, #tpu.memory_space<vmem>>, vector<1x32xf32>
    %cst_47 = arith.constant dense<0.000000e+00> : vector<8xf32>
    %111 = vector.multi_reduction <add>, %108, %cst_47 [1] : vector<8x32xf32> to vector<8xf32>
    %112 = vector.shape_cast %111 : vector<8xf32> to vector<8x1xf32>
    %cst_48 = arith.constant 3.200000e+01 : f32
    %113 = vector.broadcast %cst_48 : f32 to vector<8x1xf32>
    %114 = arith.divf %112, %113 : vector<8x1xf32>
    %115 = vector.broadcast %114 : vector<8x1xf32> to vector<8x32xf32>
    %116 = arith.subf %108, %115 : vector<8x32xf32>
    %117 = arith.mulf %116, %116 : vector<8x32xf32>
    %cst_49 = arith.constant dense<0.000000e+00> : vector<8xf32>
    %118 = vector.multi_reduction <add>, %117, %cst_49 [1] : vector<8x32xf32> to vector<8xf32>
    %119 = vector.shape_cast %118 : vector<8xf32> to vector<8x1xf32>
    %cst_50 = arith.constant 3.200000e+01 : f32
    %120 = vector.broadcast %cst_50 : f32 to vector<8x1xf32>
    %121 = arith.divf %119, %120 : vector<8x1xf32>
    %122 = vector.broadcast %114 : vector<8x1xf32> to vector<8x32xf32>
    %123 = arith.subf %108, %122 : vector<8x32xf32>
    %cst_51 = arith.constant 9.99999974E-6 : f32
    %124 = vector.broadcast %cst_51 : f32 to vector<8x1xf32>
    %125 = arith.addf %121, %124 : vector<8x1xf32>
    %126 = math.rsqrt %125 : vector<8x1xf32>
    %127 = vector.broadcast %126 : vector<8x1xf32> to vector<8x32xf32>
    %128 = arith.mulf %123, %127 : vector<8x32xf32>
    %129 = vector.broadcast %109 : vector<1x32xf32> to vector<8x32xf32>
    %130 = arith.mulf %128, %129 : vector<8x32xf32>
    %131 = vector.broadcast %110 : vector<1x32xf32> to vector<8x32xf32>
    %132 = arith.addf %130, %131 : vector<8x32xf32>
    %133 = arith.truncf %132 : vector<8x32xf32> to vector<8x32xbf16>
    %c0_52 = arith.constant 0 : index
    %c0_53 = arith.constant 0 : index
    %134 = vector.load %arg15[%c0_52, %c0_53] : memref<1x32xf32, #tpu.memory_space<vmem>>, vector<1x32xf32>
    %135 = vector.broadcast %134 : vector<1x32xf32> to vector<8x32xf32>
    %136 = arith.addf %108, %135 : vector<8x32xf32>
    %c0_54 = arith.constant 0 : index
    %c0_55 = arith.constant 0 : index
    %137 = vector.load %arg12[%c0_54, %c0_55] : memref<32x64xbf16, #tpu.memory_space<vmem>>, vector<32x64xbf16>
    %cst_56 = arith.constant dense<0.000000e+00> : vector<8x64xf32>
    %138 = tpu.matmul %133, %137, %cst_56 {dimension_numbers = #tpu.dot_dimension_numbers<[1], [0], [0], [1], [0, 0, 1, 1], [], []>} : vector<8x32xbf16>, vector<32x64xbf16>, vector<8x64xf32> -> vector<8x64xf32>
    %c0_57 = arith.constant 0 : index
    %c0_58 = arith.constant 0 : index
    %139 = vector.load %arg13[%c0_57, %c0_58] : memref<1x64xf32, #tpu.memory_space<vmem>>, vector<1x64xf32>
    %140 = vector.broadcast %139 : vector<1x64xf32> to vector<8x64xf32>
    %141 = arith.addf %138, %140 : vector<8x64xf32>
    %cst_59 = arith.constant 5.000000e-01 : f32
    %142 = vector.broadcast %cst_59 : f32 to vector<8x64xf32>
    %143 = arith.mulf %142, %141 : vector<8x64xf32>
    %cst_60 = arith.constant 1.41421354 : f32
    %144 = vector.broadcast %cst_60 : f32 to vector<8x64xf32>
    %145 = arith.divf %141, %144 : vector<8x64xf32>
    %146 = math.erf %145 : vector<8x64xf32>
    %cst_61 = arith.constant 1.000000e+00 : f32
    %147 = vector.broadcast %cst_61 : f32 to vector<8x64xf32>
    %148 = arith.addf %147, %146 : vector<8x64xf32>
    %149 = arith.mulf %143, %148 : vector<8x64xf32>
    %150 = arith.truncf %149 : vector<8x64xf32> to vector<8x64xbf16>
    %c0_62 = arith.constant 0 : index
    %c0_63 = arith.constant 0 : index
    %151 = vector.load %arg14[%c0_62, %c0_63] : memref<64x32xbf16, #tpu.memory_space<vmem>>, vector<64x32xbf16>
    %cst_64 = arith.constant dense<0.000000e+00> : vector<8x32xf32>
    %152 = tpu.matmul %150, %151, %cst_64 {dimension_numbers = #tpu.dot_dimension_numbers<[1], [0], [0], [1], [0, 0, 1, 1], [], []>} : vector<8x64xbf16>, vector<64x32xbf16>, vector<8x32xf32> -> vector<8x32xf32>
    %153 = arith.addf %136, %152 : vector<8x32xf32>
    %c0_65 = arith.constant 0 : index
    %c0_66 = arith.constant 0 : index
    %c0_67 = arith.constant 0 : index
    %154 = vector.load %arg16[%c0_65, %c0_66, %c0_67] : memref<1x8x32xf32, #tpu.memory_space<vmem>>, vector<1x8x32xf32>
    %155 = vector.shape_cast %154 : vector<1x8x32xf32> to vector<8x32xf32>
    %156 = vector.shape_cast %153 : vector<8x32xf32> to vector<1x8x32xf32>
    tpu.vector_store %arg16[%c0_65, %c0_66, %c0_67], %156 {strides = array<i32>} : memref<1x8x32xf32, #tpu.memory_space<vmem>>, vector<1x8x32xf32>,
    return
  }
  func.func @transform_0(%arg0: i32, %arg1: i32) -> (i32, i32, i32) {
    %c0_i32 = arith.constant 0 : i32
    %c0_i32_0 = arith.constant 0 : i32
    return %arg0, %arg1, %c0_i32 : i32, i32, i32
  }
  func.func @transform_1(%arg0: i32, %arg1: i32) -> (i32, i32) {
    %c0_i32 = arith.constant 0 : i32
    %c0_i32_0 = arith.constant 0 : i32
    %c0_i32_1 = arith.constant 0 : i32
    return %c0_i32, %c0_i32_0 : i32, i32
  }
  func.func @transform_2(%arg0: i32, %arg1: i32) -> (i32, i32) {
    %c0_i32 = arith.constant 0 : i32
    %c0_i32_0 = arith.constant 0 : i32
    %c0_i32_1 = arith.constant 0 : i32
    return %c0_i32, %c0_i32_0 : i32, i32
  }
  func.func @transform_3(%arg0: i32, %arg1: i32) -> (i32, i32) {
    %c0_i32 = arith.constant 0 : i32
    %c0_i32_0 = arith.constant 0 : i32
    %c0_i32_1 = arith.constant 0 : i32
    return %c0_i32, %c0_i32_0 : i32, i32
  }
  func.func @transform_4(%arg0: i32, %arg1: i32) -> (i32, i32) {
    %c0_i32 = arith.constant 0 : i32
    %c0_i32_0 = arith.constant 0 : i32
    %c0_i32_1 = arith.constant 0 : i32
    return %c0_i32, %c0_i32_0 : i32, i32
  }
  func.func @transform_5(%arg0: i32, %arg1: i32) -> (i32, i32) {
    %c0_i32 = arith.constant 0 : i32
    %c0_i32_0 = arith.constant 0 : i32
    %c0_i32_1 = arith.constant 0 : i32
    return %c0_i32, %c0_i32_0 : i32, i32
  }
  func.func @transform_6(%arg0: i32, %arg1: i32) -> (i32, i32) {
    %c0_i32 = arith.constant 0 : i32
    %c0_i32_0 = arith.constant 0 : i32
    %c0_i32_1 = arith.constant 0 : i32
    return %c0_i32, %c0_i32_0 : i32, i32
  }
  func.func @transform_7(%arg0: i32, %arg1: i32) -> (i32, i32) {
    %c0_i32 = arith.constant 0 : i32
    %c0_i32_0 = arith.constant 0 : i32
    %c0_i32_1 = arith.constant 0 : i32
    return %c0_i32, %c0_i32_0 : i32, i32
  }
  func.func @transform_8(%arg0: i32, %arg1: i32) -> (i32, i32) {
    %c0_i32 = arith.constant 0 : i32
    %c0_i32_0 = arith.constant 0 : i32
    %c0_i32_1 = arith.constant 0 : i32
    return %c0_i32, %c0_i32_0 : i32, i32
  }
  func.func @transform_9(%arg0: i32, %arg1: i32) -> (i32, i32) {
    %c0_i32 = arith.constant 0 : i32
    %c0_i32_0 = arith.constant 0 : i32
    %c0_i32_1 = arith.constant 0 : i32
    return %c0_i32, %c0_i32_0 : i32, i32
  }
  func.func @transform_10(%arg0: i32, %arg1: i32) -> (i32, i32) {
    %c0_i32 = arith.constant 0 : i32
    %c0_i32_0 = arith.constant 0 : i32
    %c0_i32_1 = arith.constant 0 : i32
    return %c0_i32, %c0_i32_0 : i32, i32
  }
  func.func @transform_11(%arg0: i32, %arg1: i32) -> (i32, i32) {
    %c0_i32 = arith.constant 0 : i32
    %c0_i32_0 = arith.constant 0 : i32
    %c0_i32_1 = arith.constant 0 : i32
    return %c0_i32, %c0_i32_0 : i32, i32
  }
  func.func @transform_12(%arg0: i32, %arg1: i32) -> (i32, i32) {
    %c0_i32 = arith.constant 0 : i32
    %c0_i32_0 = arith.constant 0 : i32
    %c0_i32_1 = arith.constant 0 : i32
    return %c0_i32, %c0_i32_0 : i32, i32
  }
  func.func @transform_13(%arg0: i32, %arg1: i32) -> (i32, i32) {
    %c0_i32 = arith.constant 0 : i32
    %c0_i32_0 = arith.constant 0 : i32
    %c0_i32_1 = arith.constant 0 : i32
    return %c0_i32, %c0_i32_0 : i32, i32
  }
  func.func @transform_14(%arg0: i32, %arg1: i32) -> (i32, i32, i32) {
    %c0_i32 = arith.constant 0 : i32
    %c0_i32_0 = arith.constant 0 : i32
    return %arg0, %arg1, %c0_i32 : i32, i32, i32
  }
}

</mosaic_0001>

<llo_original>
// kernel: tpu_custom_call.1
$region0: #{tpu_custom_call.1}
  #allocation0 [shape = 'u32[]', space=smem, size = 0x4, offset = 0x4, fixed_abs, tag = 'smem constant byte address 0x4 - core index']
  #allocation1 [shape = 'u32[144,128]{1,0:T(1,128)}', space=vmem, size = 0x12000, scoped, tag = 'internal scratch']
  #allocation2 [shape = 'bf16[8,32]{1,0:T(8,128)(2,1)}', space=vmem, size = 0x800, scoped, tag = 'scratch operand']
  #allocation3 [shape = 'bf16[8,32]{1,0:T(8,128)(2,1)}', space=vmem, size = 0x800, scoped, tag = 'scratch operand']
  #allocation4 [shape = 'bf16[8,32]{1,0:T(8,128)(2,1)}', space=vmem, size = 0x800, scoped, tag = 'scratch operand']
  %s0 = inlined_call_operand.vmem [shape: f32[2,8,32], index: 0, kind: input, shape index: {}]
  %s1 = inlined_call_operand.vmem [shape: f32[1,32], index: 1, kind: input, shape index: {}]
  %s2 = inlined_call_operand.vmem [shape: f32[1,32], index: 2, kind: input, shape index: {}]
  %s3 = inlined_call_operand.vmem [shape: bf16[32,32], index: 3, kind: input, shape index: {}]
  %s4 = inlined_call_operand.vmem [shape: bf16[32,32], index: 4, kind: input, shape index: {}]
  %s5 = inlined_call_operand.hbm [shape: bf16[32,32], index: 5, kind: input, shape index: {}]
  %s6 = inlined_call_operand.hbm [shape: bf16[32,32], index: 6, kind: input, shape index: {}]
  %s7 = inlined_call_operand.hbm [shape: f32[1,32], index: 7, kind: input, shape index: {}]
  %s8 = inlined_call_operand.hbm [shape: f32[1,32], index: 8, kind: input, shape index: {}]
  %s9 = inlined_call_operand.hbm [shape: f32[1,32], index: 9, kind: input, shape index: {}]
  %s10 = inlined_call_operand.vmem [shape: bf16[32,64], index: 10, kind: input, shape index: {}]
  %s11 = inlined_call_operand.vmem [shape: f32[1,64], index: 11, kind: input, shape index: {}]
  %s12 = inlined_call_operand.vmem [shape: bf16[64,32], index: 12, kind: input, shape index: {}]
  %s13 = inlined_call_operand.vmem [shape: f32[1,32], index: 13, kind: input, shape index: {}]
  %s14 = inlined_call_operand.hbm [shape: f32[2,8,32], index: 14, kind: output, shape index: {}]
  %s15 = sld [smem:[#allocation0]]
  $region113: #{tpu_custom_call.1} parent=0
    _
  %s17 = ssub.s32 1, %s15
  %s18 = scalar_select 0, %s17, %s15
  $region1: #{tpu_custom_call.1} parent=0
    #allocation5 [shape = 'u8[8192]{0}', space=vmem, size = 0x2000, scoped, tag = 'input window, operand 5, single buffered']
    #allocation6 [shape = 's32[2]{0}', space=sflag, size = 0x8, scoped, tag = 'scoped memory for tpu_custom_call.1']
    #allocation7 [shape = 's32[2]{0}', space=sflag, size = 0x8, scoped, tag = 'scoped memory for tpu_custom_call.1']
    #allocation8 [shape = 'u8[8192]{0}', space=vmem, size = 0x2000, scoped, tag = 'input window, operand 6, single buffered']
    #allocation9 [shape = 's32[1]{0}', space=sflag, size = 0x4, scoped, tag = 'scoped memory for tpu_custom_call.1']
    #allocation10 [shape = 'u8[512]{0}', space=vmem, size = 0x400, scoped, tag = 'input window, operand 7, single buffered']
    #allocation11 [shape = 'u8[512]{0}', space=vmem, size = 0x400, scoped, tag = 'input window, operand 8, single buffered']
    #allocation12 [shape = 's32[1]{0}', space=sflag, size = 0x4, scoped, tag = 'scoped memory for tpu_custom_call.1']
    #allocation13 [shape = 'u8[512]{0}', space=vmem, size = 0x400, scoped, tag = 'input window, operand 9, single buffered']
    #allocation14 [shape = 'u8[8192]{0}', space=vmem, size = 0x2000, scoped, tag = 'output window, operand 0']
    %19 = vsyncpa [#allocation6], 0
    %20 = vsyncpa [#allocation9], 0
    %21 = vsyncpa [#allocation12], 0
    %22 = vsyncpa [#allocation7], 0
    %s23 = scalar_lea.sflag [#allocation7], 1
    %24 = vsyncpa %s23, 0
    loop: start=0, step=1, limit=4
    $region2: #{tpu_custom_call.1} parent=1 // loop_pre_header
      _
    $region3: #{tpu_custom_call.1} parent=1 // loop_header
      %s26 = sphi 0, %s30
      %p27 = scmp.ge.s32.totalorder %s26, 4
      %s33 = sphi 0, %s45
      %s34 = sphi 0, %s41
      %s35 = sphi 0, %s33
      %s36 = sphi 0, %s34
      %s37 = sphi 0, %s35
      %s38 = sphi 0, %s36
      %s50 = sphi 0, %s52
      %s53 = sphi 0, %s50
      %s54 = sphi 0, %s53
      %s70 = sphi 0, %s54
      %s74 = sphi 0, %s74
      %s76 = sphi 0, %s74
      %s77 = sphi 0, %s76
      %s91 = sphi 0, %s77
      %s95 = sphi 0, %s95
      %s97 = sphi 0, %s95
      %s98 = sphi 0, %s97
      %s112 = sphi 0, %s98
      %s116 = sphi 0, %s116
      %s118 = sphi 0, %s116
      %s119 = sphi 0, %s118
      %s133 = sphi 0, %s119
      %s137 = sphi 0, %s137
      %s139 = sphi 0, %s137
      %s140 = sphi 0, %s139
      %s154 = sphi 0, %s140
      %s158 = sphi 0, %s158
      %s160 = sphi 0, %s158
      %s161 = sphi 0, %s160
      %s175 = sphi 0, %s161
      %s179 = sphi 0, %s179
      %s181 = sphi 0, %s179
      %s182 = sphi 0, %s181
      %s196 = sphi 0, %s182
      %s200 = sphi 0, %s200
      %s202 = sphi 0, %s200
      %s203 = sphi 0, %s202
      %s217 = sphi 0, %s203
      %s221 = sphi 0, %s221
      %s223 = sphi 0, %s221
      %s224 = sphi 0, %s223
      %s238 = sphi 0, %s224
      %s242 = sphi 0, %s242
      %s244 = sphi 0, %s242
      %s245 = sphi 0, %s244
      %s259 = sphi 0, %s245
      %s263 = sphi 0, %s263
      %s265 = sphi 0, %s263
      %s266 = sphi 0, %s265
      %s280 = sphi 0, %s266
      %s284 = sphi 0, %s284
      %s286 = sphi 0, %s284
      %s287 = sphi 0, %s286
      %s301 = sphi 0, %s287
      %s305 = sphi 0, %s305
      %s307 = sphi 0, %s305
      %s308 = sphi 0, %s307
      %s322 = sphi 0, %s308
      %s326 = sphi 0, %s326
      %s328 = sphi 0, %s326
      %s329 = sphi 0, %s328
      %s343 = sphi 0, %s329
      %s351 = sphi 0, %s353
      %s354 = sphi 0, %s351
      %s355 = sphi 0, %s354
      %s371 = sphi 0, %s355
    $region4: #{tpu_custom_call.1} parent=1 // loop_header_branch
      %29 = sbr.rel (%p27) target = $region8
    $region5: #{tpu_custom_call.1} parent=1 // loop_body
      %s31 = ssub.s32 %s26, 1
      %s32 = ssub.s32 %s26, 2
      %s39 = sadd.s32 1, %s34
      %p40 = scmp.ge.s32.totalorder %s39, 1
      %s41 = scalar_select %p40, 0, %s39
      %s42 = sadd.s32 1, %s33
      %s43 = scalar_select %p40, %s42, %s33
      %p44 = scmp.ge.s32.totalorder %s43, 2
      %s45 = scalar_select %p44, 0, %s43
      %s46 = ssub.s32 %s33, %s45
      %s47 = ssub.s32 %s34, %s41
      %s48 = sor.u32 %s46, %s47
      %p49 = scmp.eq.s32.totalorder %s48, 0
      %s51 = sadd.s32 %s50, 1
      %s52 = scalar_select %p49, %s50, %s51
      %p55 = pneg %p49
      %p56 = scmp.eq.s32.totalorder %s26, 1
      %p57 = por %p55, %p56
      %p58 = scmp.ne.s32.totalorder %s50, %s53
      %p59 = scmp.eq.s32.totalorder %s26, 0
      %p60 = por %p58, %p59
      %p61 = scmp.ne.s32.totalorder %s50, %s53
      %p62 = scmp.eq.s32.totalorder %s31, 1
      %p63 = por %p61, %p62
      %p64 = scmp.ne.s32.totalorder %s53, %s54
      %p65 = scmp.eq.s32.totalorder %s31, 0
      %p66 = por %p64, %p65
      %p67 = scmp.ne.s32.totalorder %s53, %s54
      %p68 = scmp.eq.s32.totalorder %s32, 1
      %p69 = por %p67, %p68
      %p71 = scmp.ne.s32.totalorder %s54, %s70
      %p72 = scmp.eq.s32.totalorder %s32, 0
      %p73 = por %p71, %p72
      %s75 = sadd.s32 %s74, 1
      %p78 = scmp.eq.s32.totalorder %s26, 1
      %p79 = scmp.ne.s32.totalorder %s74, %s76
      %p80 = scmp.eq.s32.totalorder %s26, 0
      %p81 = por %p79, %p80
      %p82 = scmp.ne.s32.totalorder %s74, %s76
      %p83 = scmp.eq.s32.totalorder %s31, 1
      %p84 = por %p82, %p83
      %p85 = scmp.ne.s32.totalorder %s76, %s77
      %p86 = scmp.eq.s32.totalorder %s31, 0
      %p87 = por %p85, %p86
      %p88 = scmp.ne.s32.totalorder %s76, %s77
      %p89 = scmp.eq.s32.totalorder %s32, 1
      %p90 = por %p88, %p89
      %p92 = scmp.ne.s32.totalorder %s77, %s91
      %p93 = scmp.eq.s32.totalorder %s32, 0
      %p94 = por %p92, %p93
      %s96 = sadd.s32 %s95, 1
      %p99 = scmp.eq.s32.totalorder %s26, 1
      %p100 = scmp.ne.s32.totalorder %s95, %s97
      %p101 = scmp.eq.s32.totalorder %s26, 0
      %p102 = por %p100, %p101
      %p103 = scmp.ne.s32.totalorder %s95, %s97
      %p104 = scmp.eq.s32.totalorder %s31, 1
      %p105 = por %p103, %p104
      %p106 = scmp.ne.s32.totalorder %s97, %s98
      %p107 = scmp.eq.s32.totalorder %s31, 0
      %p108 = por %p106, %p107
      %p109 = scmp.ne.s32.totalorder %s97, %s98
      %p110 = scmp.eq.s32.totalorder %s32, 1
      %p111 = por %p109, %p110
      %p113 = scmp.ne.s32.totalorder %s98, %s112
      %p114 = scmp.eq.s32.totalorder %s32, 0
      %p115 = por %p113, %p114
      %s117 = sadd.s32 %s116, 1
      %p120 = scmp.eq.s32.totalorder %s26, 1
      %p121 = scmp.ne.s32.totalorder %s116, %s118
      %p122 = scmp.eq.s32.totalorder %s26, 0
      %p123 = por %p121, %p122
      %p124 = scmp.ne.s32.totalorder %s116, %s118
      %p125 = scmp.eq.s32.totalorder %s31, 1
      %p126 = por %p124, %p125
      %p127 = scmp.ne.s32.totalorder %s118, %s119
      %p128 = scmp.eq.s32.totalorder %s31, 0
      %p129 = por %p127, %p128
      %p130 = scmp.ne.s32.totalorder %s118, %s119
      %p131 = scmp.eq.s32.totalorder %s32, 1
      %p132 = por %p130, %p131
      %p134 = scmp.ne.s32.totalorder %s119, %s133
      %p135 = scmp.eq.s32.totalorder %s32, 0
      %p136 = por %p134, %p135
      %s138 = sadd.s32 %s137, 1
      %p141 = scmp.eq.s32.totalorder %s26, 1
      %p142 = scmp.ne.s32.totalorder %s137, %s139
      %p143 = scmp.eq.s32.totalorder %s26, 0
      %p144 = por %p142, %p143
      %p145 = scmp.ne.s32.totalorder %s137, %s139
      %p146 = scmp.eq.s32.totalorder %s31, 1
      %p147 = por %p145, %p146
      %p148 = scmp.ne.s32.totalorder %s139, %s140
      %p149 = scmp.eq.s32.totalorder %s31, 0
      %p150 = por %p148, %p149
      %p151 = scmp.ne.s32.totalorder %s139, %s140
      %p152 = scmp.eq.s32.totalorder %s32, 1
      %p153 = por %p151, %p152
      %p155 = scmp.ne.s32.totalorder %s140, %s154
      %p156 = scmp.eq.s32.totalorder %s32, 0
      %p157 = por %p155, %p156
      %s159 = sadd.s32 %s158, 1
      %p162 = scmp.eq.s32.totalorder %s26, 1
      %p163 = scmp.ne.s32.totalorder %s158, %s160
      %p164 = scmp.eq.s32.totalorder %s26, 0
      %p165 = por %p163, %p164
      %p166 = scmp.ne.s32.totalorder %s158, %s160
      %p167 = scmp.eq.s32.totalorder %s31, 1
      %p168 = por %p166, %p167
      %p169 = scmp.ne.s32.totalorder %s160, %s161
      %p170 = scmp.eq.s32.totalorder %s31, 0
      %p171 = por %p169, %p170
      %p172 = scmp.ne.s32.totalorder %s160, %s161
      %p173 = scmp.eq.s32.totalorder %s32, 1
      %p174 = por %p172, %p173
      %p176 = scmp.ne.s32.totalorder %s161, %s175
      %p177 = scmp.eq.s32.totalorder %s32, 0
      %p178 = por %p176, %p177
      %s180 = sadd.s32 %s179, 1
      %p183 = scmp.eq.s32.totalorder %s26, 1
      %p184 = scmp.ne.s32.totalorder %s179, %s181
      %p185 = scmp.eq.s32.totalorder %s26, 0
      %p186 = por %p184, %p185
      %p187 = scmp.ne.s32.totalorder %s179, %s181
      %p188 = scmp.eq.s32.totalorder %s31, 1
      %p189 = por %p187, %p188
      %p190 = scmp.ne.s32.totalorder %s181, %s182
      %p191 = scmp.eq.s32.totalorder %s31, 0
      %p192 = por %p190, %p191
      %p193 = scmp.ne.s32.totalorder %s181, %s182
      %p194 = scmp.eq.s32.totalorder %s32, 1
      %p195 = por %p193, %p194
      %p197 = scmp.ne.s32.totalorder %s182, %s196
      %p198 = scmp.eq.s32.totalorder %s32, 0
      %p199 = por %p197, %p198
      %s201 = sadd.s32 %s200, 1
      %p204 = scmp.eq.s32.totalorder %s26, 1
      %p205 = scmp.ne.s32.totalorder %s200, %s202
      %p206 = scmp.eq.s32.totalorder %s26, 0
      %p207 = por %p205, %p206
      %p208 = scmp.ne.s32.totalorder %s200, %s202
      %p209 = scmp.eq.s32.totalorder %s31, 1
      %p210 = por %p208, %p209
      %p211 = scmp.ne.s32.totalorder %s202, %s203
      %p212 = scmp.eq.s32.totalorder %s31, 0
      %p213 = por %p211, %p212
      %p214 = scmp.ne.s32.totalorder %s202, %s203
      %p215 = scmp.eq.s32.totalorder %s32, 1
      %p216 = por %p214, %p215
      %p218 = scmp.ne.s32.totalorder %s203, %s217
      %p219 = scmp.eq.s32.totalorder %s32, 0
      %p220 = por %p218, %p219
      %s222 = sadd.s32 %s221, 1
      %p225 = scmp.eq.s32.totalorder %s26, 1
      %p226 = scmp.ne.s32.totalorder %s221, %s223
      %p227 = scmp.eq.s32.totalorder %s26, 0
      %p228 = por %p226, %p227
      %p229 = scmp.ne.s32.totalorder %s221, %s223
      %p230 = scmp.eq.s32.totalorder %s31, 1
      %p231 = por %p229, %p230
      %p232 = scmp.ne.s32.totalorder %s223, %s224
      %p233 = scmp.eq.s32.totalorder %s31, 0
      %p234 = por %p232, %p233
      %p235 = scmp.ne.s32.totalorder %s223, %s224
      %p236 = scmp.eq.s32.totalorder %s32, 1
      %p237 = por %p235, %p236
      %p239 = scmp.ne.s32.totalorder %s224, %s238
      %p240 = scmp.eq.s32.totalorder %s32, 0
      %p241 = por %p239, %p240
      %s243 = sadd.s32 %s242, 1
      %p246 = scmp.eq.s32.totalorder %s26, 1
      %p247 = scmp.ne.s32.totalorder %s242, %s244
      %p248 = scmp.eq.s32.totalorder %s26, 0
      %p249 = por %p247, %p248
      %p250 = scmp.ne.s32.totalorder %s242, %s244
      %p251 = scmp.eq.s32.totalorder %s31, 1
      %p252 = por %p250, %p251
      %p253 = scmp.ne.s32.totalorder %s244, %s245
      %p254 = scmp.eq.s32.totalorder %s31, 0
      %p255 = por %p253, %p254
      %p256 = scmp.ne.s32.totalorder %s244, %s245
      %p257 = scmp.eq.s32.totalorder %s32, 1
      %p258 = por %p256, %p257
      %p260 = scmp.ne.s32.totalorder %s245, %s259
      %p261 = scmp.eq.s32.totalorder %s32, 0
      %p262 = por %p260, %p261
      %s264 = sadd.s32 %s263, 1
      %p267 = scmp.eq.s32.totalorder %s26, 1
      %p268 = scmp.ne.s32.totalorder %s263, %s265
      %p269 = scmp.eq.s32.totalorder %s26, 0
      %p270 = por %p268, %p269
      %p271 = scmp.ne.s32.totalorder %s263, %s265
      %p272 = scmp.eq.s32.totalorder %s31, 1
      %p273 = por %p271, %p272
      %p274 = scmp.ne.s32.totalorder %s265, %s266
      %p275 = scmp.eq.s32.totalorder %s31, 0
      %p276 = por %p274, %p275
      %p277 = scmp.ne.s32.totalorder %s265, %s266
      %p278 = scmp.eq.s32.totalorder %s32, 1
      %p279 = por %p277, %p278
      %p281 = scmp.ne.s32.totalorder %s266, %s280
      %p282 = scmp.eq.s32.totalorder %s32, 0
      %p283 = por %p281, %p282
      %s285 = sadd.s32 %s284, 1
      %p288 = scmp.eq.s32.totalorder %s26, 1
      %p289 = scmp.ne.s32.totalorder %s284, %s286
      %p290 = scmp.eq.s32.totalorder %s26, 0
      %p291 = por %p289, %p290
      %p292 = scmp.ne.s32.totalorder %s284, %s286
      %p293 = scmp.eq.s32.totalorder %s31, 1
      %p294 = por %p292, %p293
      %p295 = scmp.ne.s32.totalorder %s286, %s287
      %p296 = scmp.eq.s32.totalorder %s31, 0
      %p297 = por %p295, %p296
      %p298 = scmp.ne.s32.totalorder %s286, %s287
      %p299 = scmp.eq.s32.totalorder %s32, 1
      %p300 = por %p298, %p299
      %p302 = scmp.ne.s32.totalorder %s287, %s301
      %p303 = scmp.eq.s32.totalorder %s32, 0
      %p304 = por %p302, %p303
      %s306 = sadd.s32 %s305, 1
      %p309 = scmp.eq.s32.totalorder %s26, 1
      %p310 = scmp.ne.s32.totalorder %s305, %s307
      %p311 = scmp.eq.s32.totalorder %s26, 0
      %p312 = por %p310, %p311
      %p313 = scmp.ne.s32.totalorder %s305, %s307
      %p314 = scmp.eq.s32.totalorder %s31, 1
      %p315 = por %p313, %p314
      %p316 = scmp.ne.s32.totalorder %s307, %s308
      %p317 = scmp.eq.s32.totalorder %s31, 0
      %p318 = por %p316, %p317
      %p319 = scmp.ne.s32.totalorder %s307, %s308
      %p320 = scmp.eq.s32.totalorder %s32, 1
      %p321 = por %p319, %p320
      %p323 = scmp.ne.s32.totalorder %s308, %s322
      %p324 = scmp.eq.s32.totalorder %s32, 0
      %p325 = por %p323, %p324
      %s327 = sadd.s32 %s326, 1
      %p330 = scmp.eq.s32.totalorder %s26, 1
      %p331 = scmp.ne.s32.totalorder %s326, %s328
      %p332 = scmp.eq.s32.totalorder %s26, 0
      %p333 = por %p331, %p332
      %p334 = scmp.ne.s32.totalorder %s326, %s328
      %p335 = scmp.eq.s32.totalorder %s31, 1
      %p336 = por %p334, %p335
      %p337 = scmp.ne.s32.totalorder %s328, %s329
      %p338 = scmp.eq.s32.totalorder %s31, 0
      %p339 = por %p337, %p338
      %p340 = scmp.ne.s32.totalorder %s328, %s329
      %p341 = scmp.eq.s32.totalorder %s32, 1
      %p342 = por %p340, %p341
      %p344 = scmp.ne.s32.totalorder %s329, %s343
      %p345 = scmp.eq.s32.totalorder %s32, 0
      %p346 = por %p344, %p345
      %s347 = ssub.s32 %s33, %s45
      %s348 = ssub.s32 %s34, %s41
      %s349 = sor.u32 %s347, %s348
      %p350 = scmp.eq.s32.totalorder %s349, 0
      %s352 = sadd.s32 %s351, 1
      %s353 = scalar_select %p350, %s351, %s352
      %p356 = pneg %p350
      %p357 = scmp.eq.s32.totalorder %s26, 1
      %p358 = por %p356, %p357
      %p359 = scmp.ne.s32.totalorder %s351, %s354
      %p360 = scmp.eq.s32.totalorder %s26, 0
      %p361 = por %p359, %p360
      %p362 = scmp.ne.s32.totalorder %s351, %s354
      %p363 = scmp.eq.s32.totalorder %s31, 1
      %p364 = por %p362, %p363
      %p365 = scmp.ne.s32.totalorder %s354, %s355
      %p366 = scmp.eq.s32.totalorder %s31, 0
      %p367 = por %p365, %p366
      %p368 = scmp.ne.s32.totalorder %s354, %s355
      %p369 = scmp.eq.s32.totalorder %s32, 1
      %p370 = por %p368, %p369
      %p372 = scmp.ne.s32.totalorder %s355, %s371
      %p373 = scmp.eq.s32.totalorder %s32, 0
      %p374 = por %p372, %p373
      %p375 = scmp.le.s32.totalorder 1, %s26
      %p376 = scmp.lt.s32.totalorder %s26, 3
      %p377 = pnand %p375, %p376
      %p378 = pneg %p377
      // Predicated region
      $region9: #{tpu_custom_call.1} parent=5 // pred_check
        _
      $region10: #{tpu_custom_call.1} parent=5 // pred_check_branch
        %380 = sbr.rel (%p377) target = $region12
      $region11: #{tpu_custom_call.1} parent=5 // pred_region
        %s381 = ssub.s32 %s26, 1
        // Predicated region
        $region13: #{tpu_custom_call.1} parent=11 // pred_check
          %p382 = pneg %p87
        $region14: #{tpu_custom_call.1} parent=11 // pred_check_branch
          %384 = sbr.rel (%p382) target = $region16
        $region15: #{tpu_custom_call.1} parent=11 // pred_region
          _
        $region16: #{tpu_custom_call.1} parent=11 // pred_fallthru
          _
        // Predicated region
        $region17: #{tpu_custom_call.1} parent=11 // pred_check
          %p385 = pneg %p108
        $region18: #{tpu_custom_call.1} parent=11 // pred_check_branch
          %387 = sbr.rel (%p385) target = $region20
        $region19: #{tpu_custom_call.1} parent=11 // pred_region
          _
        $region20: #{tpu_custom_call.1} parent=11 // pred_fallthru
          _
        // Predicated region
        $region21: #{tpu_custom_call.1} parent=11 // pred_check
          %p388 = pneg %p129
        $region22: #{tpu_custom_call.1} parent=11 // pred_check_branch
          %390 = sbr.rel (%p388) target = $region24
        $region23: #{tpu_custom_call.1} parent=11 // pred_region
          _
        $region24: #{tpu_custom_call.1} parent=11 // pred_fallthru
          _
        // Predicated region
        $region25: #{tpu_custom_call.1} parent=11 // pred_check
          %p391 = pneg %p150
        $region26: #{tpu_custom_call.1} parent=11 // pred_check_branch
          %393 = sbr.rel (%p391) target = $region28
        $region27: #{tpu_custom_call.1} parent=11 // pred_region
          _
        $region28: #{tpu_custom_call.1} parent=11 // pred_fallthru
          _
        // Predicated region
        $region29: #{tpu_custom_call.1} parent=11 // pred_check
          %p394 = pneg %p171
        $region30: #{tpu_custom_call.1} parent=11 // pred_check_branch
          %396 = sbr.rel (%p394) target = $region32
        $region31: #{tpu_custom_call.1} parent=11 // pred_region
          %s398 = ssub.s32 256, 256
          %399 = vsyncadd [#allocation6], %s398
          %s400 = sshll.u32 [#allocation5], 4
          %s401 = int_to_ptr.vmem [resolvable:$true] %s400
          %406 = dma.hbm_to_vmem [thread:$0]  %s5, 256, %s401, [#allocation6], 64, 64, 4
        $region32: #{tpu_custom_call.1} parent=11 // pred_fallthru
          _
        // Predicated region
        $region33: #{tpu_custom_call.1} parent=11 // pred_check
          %p407 = pneg %p192
        $region34: #{tpu_custom_call.1} parent=11 // pred_check_branch
          %409 = sbr.rel (%p407) target = $region36
        $region35: #{tpu_custom_call.1} parent=11 // pred_region
          %s411 = ssub.s32 256, 256
          %412 = vsyncadd [#allocation9], %s411
          %s413 = sshll.u32 [#allocation8], 4
          %s414 = int_to_ptr.vmem [resolvable:$true] %s413
          %419 = dma.hbm_to_vmem [thread:$0]  %s6, 256, %s414, [#allocation9], 64, 64, 4
        $region36: #{tpu_custom_call.1} parent=11 // pred_fallthru
          _
        // Predicated region
        $region37: #{tpu_custom_call.1} parent=11 // pred_check
          %p420 = pneg %p213
        $region38: #{tpu_custom_call.1} parent=11 // pred_check_branch
          %422 = sbr.rel (%p420) target = $region40
        $region39: #{tpu_custom_call.1} parent=11 // pred_region
          %s424 = ssub.s32 16, 16
          %425 = vsyncadd [#allocation9], %s424
          %s427 = sshll.u32 [#allocation10], 4
          %s428 = int_to_ptr.vmem [resolvable:$true] %s427
          %430 = dma.hbm_to_vmem [thread:$0]  %s7, 16, %s428, [#allocation9]
        $region40: #{tpu_custom_call.1} parent=11 // pred_fallthru
          _
        // Predicated region
        $region41: #{tpu_custom_call.1} parent=11 // pred_check
          %p431 = pneg %p234
        $region42: #{tpu_custom_call.1} parent=11 // pred_check_branch
          %433 = sbr.rel (%p431) target = $region44
        $region43: #{tpu_custom_call.1} parent=11 // pred_region
          %s435 = ssub.s32 16, 16
          %436 = vsyncadd [#allocation12], %s435
          %s438 = sshll.u32 [#allocation11], 4
          %s439 = int_to_ptr.vmem [resolvable:$true] %s438
          %441 = dma.hbm_to_vmem [thread:$0]  %s8, 16, %s439, [#allocation12]
        $region44: #{tpu_custom_call.1} parent=11 // pred_fallthru
          _
        // Predicated region
        $region45: #{tpu_custom_call.1} parent=11 // pred_check
          %p442 = pneg %p255
        $region46: #{tpu_custom_call.1} parent=11 // pred_check_branch
          %444 = sbr.rel (%p442) target = $region48
        $region47: #{tpu_custom_call.1} parent=11 // pred_region
          %s446 = ssub.s32 16, 16
          %447 = vsyncadd [#allocation12], %s446
          %s449 = sshll.u32 [#allocation13], 4
          %s450 = int_to_ptr.vmem [resolvable:$true] %s449
          %452 = dma.hbm_to_vmem [thread:$0]  %s9, 16, %s450, [#allocation12]
        $region48: #{tpu_custom_call.1} parent=11 // pred_fallthru
          _
        // Predicated region
        $region49: #{tpu_custom_call.1} parent=11 // pred_check
          %p453 = pneg %p276
        $region50: #{tpu_custom_call.1} parent=11 // pred_check_branch
          %455 = sbr.rel (%p453) target = $region52
        $region51: #{tpu_custom_call.1} parent=11 // pred_region
          _
        $region52: #{tpu_custom_call.1} parent=11 // pred_fallthru
          _
        // Predicated region
        $region53: #{tpu_custom_call.1} parent=11 // pred_check
          %p456 = pneg %p297
        $region54: #{tpu_custom_call.1} parent=11 // pred_check_branch
          %458 = sbr.rel (%p456) target = $region56
        $region55: #{tpu_custom_call.1} parent=11 // pred_region
          _
        $region56: #{tpu_custom_call.1} parent=11 // pred_fallthru
          _
        // Predicated region
        $region57: #{tpu_custom_call.1} parent=11 // pred_check
          %p459 = pneg %p318
        $region58: #{tpu_custom_call.1} parent=11 // pred_check_branch
          %461 = sbr.rel (%p459) target = $region60
        $region59: #{tpu_custom_call.1} parent=11 // pred_region
          _
        $region60: #{tpu_custom_call.1} parent=11 // pred_fallthru
          _
        // Predicated region
        $region61: #{tpu_custom_call.1} parent=11 // pred_check
          %p462 = pneg %p339
        $region62: #{tpu_custom_call.1} parent=11 // pred_check_branch
          %464 = sbr.rel (%p462) target = $region64
        $region63: #{tpu_custom_call.1} parent=11 // pred_region
          _
        $region64: #{tpu_custom_call.1} parent=11 // pred_fallthru
          _
      $region12: #{tpu_custom_call.1} parent=5 // pred_fallthru
        _
      %p465 = scmp.lt.s32.totalorder %s26, 2
      // Predicated region
      $region65: #{tpu_custom_call.1} parent=5 // pred_check
        %p466 = pneg %p465
      $region66: #{tpu_custom_call.1} parent=5 // pred_check_branch
        %468 = sbr.rel (%p466) target = $region68
      $region67: #{tpu_custom_call.1} parent=5 // pred_region
        // Predicated region
        $region69: #{tpu_custom_call.1} parent=67 // pred_check
          %p469 = pneg %p60
        $region70: #{tpu_custom_call.1} parent=67 // pred_check_branch
          %471 = sbr.rel (%p469) target = $region72
        $region71: #{tpu_custom_call.1} parent=67 // pred_region
          %p472 = scmp.lt.s32.totalorder %s33, 1
          %s473 = scalar_select %p472, %s33, 1
          %p474 = scmp.lt.s32.totalorder %s34, 0
          %s475 = scalar_select %p474, %s34, 0
          %s476 = sadd.s32 %s475, %s473
          %s477 = smul.addr %s476, 8
          %s478 = scalar_lea.vmem %s0, %s477
        $region72: #{tpu_custom_call.1} parent=67 // pred_fallthru
          _
      $region68: #{tpu_custom_call.1} parent=5 // pred_fallthru
        _
      %p479 = scmp.le.s32.totalorder 1, %s26
      %p480 = scmp.lt.s32.totalorder %s26, 3
      %p481 = pnand %p479, %p480
      %p482 = pneg %p481
      // Predicated region
      $region73: #{tpu_custom_call.1} parent=5 // pred_check
        _
      $region74: #{tpu_custom_call.1} parent=5 // pred_check_branch
        %484 = sbr.rel (%p481) target = $region76
      $region75: #{tpu_custom_call.1} parent=5 // pred_region
        %s485 = ssub.s32 %s26, 1
        // Predicated region
        $region77: #{tpu_custom_call.1} parent=75 // pred_check
          %p486 = pneg %p171
        $region78: #{tpu_custom_call.1} parent=75 // pred_check_branch
          %488 = sbr.rel (%p486) target = $region80
        $region79: #{tpu_custom_call.1} parent=75 // pred_region
          %489 = dma.done [#allocation6], 256
        $region80: #{tpu_custom_call.1} parent=75 // pred_fallthru
          _
        // Predicated region
        $region81: #{tpu_custom_call.1} parent=75 // pred_check
          %p490 = pneg %p192
        $region82: #{tpu_custom_call.1} parent=75 // pred_check_branch
          %492 = sbr.rel (%p490) target = $region84
        $region83: #{tpu_custom_call.1} parent=75 // pred_region
          %493 = dma.done [#allocation9], 256
        $region84: #{tpu_custom_call.1} parent=75 // pred_fallthru
          _
        // Predicated region
        $region85: #{tpu_custom_call.1} parent=75 // pred_check
          %p494 = pneg %p213
        $region86: #{tpu_custom_call.1} parent=75 // pred_check_branch
          %496 = sbr.rel (%p494) target = $region88
        $region87: #{tpu_custom_call.1} parent=75 // pred_region
          %497 = dma.done [#allocation9], 16
        $region88: #{tpu_custom_call.1} parent=75 // pred_fallthru
          _
        // Predicated region
        $region89: #{tpu_custom_call.1} parent=75 // pred_check
          %p498 = pneg %p234
        $region90: #{tpu_custom_call.1} parent=75 // pred_check_branch
          %500 = sbr.rel (%p498) target = $region92
        $region91: #{tpu_custom_call.1} parent=75 // pred_region
          %501 = dma.done [#allocation12], 16
        $region92: #{tpu_custom_call.1} parent=75 // pred_fallthru
          _
        // Predicated region
        $region93: #{tpu_custom_call.1} parent=75 // pred_check
          %p502 = pneg %p255
        $region94: #{tpu_custom_call.1} parent=75 // pred_check_branch
          %504 = sbr.rel (%p502) target = $region96
        $region95: #{tpu_custom_call.1} parent=75 // pred_region
          %505 = dma.done [#allocation12], 16
        $region96: #{tpu_custom_call.1} parent=75 // pred_fallthru
          _
        %p506 = scmp.lt.s32.totalorder %s35, 1
        %s507 = scalar_select %p506, %s35, 1
        %p508 = scmp.lt.s32.totalorder %s36, 0
        %s509 = scalar_select %p508, %s36, 0
        %s510 = sadd.s32 %s509, %s507
        %s511 = smul.addr %s510, 8
        %s512 = scalar_lea.vmem %s0, %s511
        %p513 = pneg %p66
        %p514 = pneg %p63
        %p515 = pneg %p87
        %p516 = pneg %p84
        %p517 = pneg %p108
        %p518 = pneg %p105
        %p519 = pneg %p129
        %p520 = pneg %p126
        %p521 = pneg %p150
        %p522 = pneg %p147
        %p523 = pneg %p171
        %p524 = pneg %p168
        %p525 = pneg %p192
        %p526 = pneg %p189
        %p527 = pneg %p213
        %p528 = pneg %p210
        %p529 = pneg %p234
        %p530 = pneg %p231
        %p531 = pneg %p255
        %p532 = pneg %p252
        %p533 = pneg %p276
        %p534 = pneg %p273
        %p535 = pneg %p297
        %p536 = pneg %p294
        %p537 = pneg %p318
        %p538 = pneg %p315
        %p539 = pneg %p339
        %p540 = pneg %p336
        %p541 = pneg %p367
        %p542 = pneg %p364
        %s543 = sand.u32 %s354, 1
        %s544 = scalar_lea.sflag [#allocation7], %s543
        %s545 = sand.u32 %s354, 1
        %s546 = smul.addr %s545, 8
        %s547 = scalar_lea.vmem [#allocation14], %s546
        %p548 = scmp.lt.s32.totalorder %s35, 1
        %s549 = scalar_select %p548, %s35, 1
        %p550 = scmp.lt.s32.totalorder %s36, 0
        %s551 = scalar_select %p550, %s36, 0
        %s552 = sadd.s32 %s551, %s549
        %s553 = smul.addr %s552, 8
        %s554 = scalar_lea.vmem %s0, %s553
        %v556 = vld [vmem:[%s554] sm:$0xff]
        %v557 = vld [vmem:[%s1] sm:$0x1]
        %v558 = vld [vmem:[%s2] sm:$0x1]
        %vm559 = vcmask 261120
        %v560 = vsel %vm559, %v556, 0.0
        %561 = vadd.xlane.f32.xlu0 %v560
        %v562 = vpop.xlane.xlu0 %561
        %v563 = vrcp.pop 32.0
        %v564 = vmul.f32 %v562, %v563
        %v565 = vsub.f32 %v556, %v564
        %v566 = vmul.f32 %v565, %v565
        %v567 = vsel %vm559, %v566, 0.0
        %568 = vadd.xlane.f32.xlu0 %v567
        %v569 = vpop.xlane.xlu0 %568
        %v570 = vmul.f32 %v569, %v563
        %v571 = vadd.f32 %v570, 1e-05
        %v572 = vrsqrt.pop %v571
        %v573 = vmul.f32 %v565, %v572
        %v575 = vlaneseq
        %v576 = vshrl.u32 %v575, 7
        %v577 = vsub.s32 0, %v576
        %v578 = vrot.slane %v557, %v577
        %v580 = vmul.f32 %v573, %v578
        %v582 = vlaneseq
        %v583 = vshrl.u32 %v582, 7
        %v584 = vsub.s32 0, %v583
        %v585 = vrot.slane %v558, %v584
        %v587 = vadd.f32 %v580, %v585
        %v588 = vpack.c.bf16 %v587, %v587
        %v589 = vld [vmem:[%s3] sm:$0xf]
        %v590 = vld [vmem:[%s3 + $0x4] sm:$0xf]
        %v591 = vld [vmem:[%s3 + $0x8] sm:$0xf]
        %v592 = vld [vmem:[%s3 + $0xc] sm:$0xf]
        %v597 = vunpack.c.l.b16 %v589
        %v598 = vunpack.c.l.b16 %v590
        %v599 = vunpack.c.l.b16 %v591
        %v600 = vunpack.c.l.b16 %v592
        %v601 = vpack.c.b16 %v598, %v597
        %v602 = vpack.c.b16 %v600, %v599
        %v606 = vsel %vm559, %v588, 0
        %608 = vmatprep.subr.bf16.mxu0 0
        %609 = vmatpush1.bf16.msra.mxu0 %v601
        %610 = vmatprep.subr.bf16.mxu0 0
        %611 = vmatpush1.bf16.msra.mxu0 %v602
        %612 = vmatprep.subr.bf16.mxu0 0
        %613 = vmatpush1.bf16.msra.mxu0 0
        %614 = vmatprep.subr.bf16.mxu0 0
        %615 = vmatpush1.bf16.msra.mxu0 0
        %616 = vmatprep.subr.bf16.mxu0 0
        %617 = vmatpush1.bf16.msra.mxu0 0
        %618 = vmatprep.subr.bf16.mxu0 0
        %619 = vmatpush1.bf16.msra.mxu0 0
        %620 = vmatprep.subr.bf16.mxu0 0
        %621 = vmatpush1.bf16.msra.mxu0 0
        %622 = vmatprep.subr.bf16.mxu0 0
        %623 = vmatpush1.bf16.msra.mxu0 0
        %624 = vmatprep.subr.bf16.mxu0 0
        %625 = vmatpush1.bf16.msra.mxu0 0
        %626 = vmatprep.subr.bf16.mxu0 0
        %627 = vmatpush1.bf16.msra.mxu0 0
        %628 = vmatprep.subr.bf16.mxu0 0
        %629 = vmatpush1.bf16.msra.mxu0 0
        %630 = vmatprep.subr.bf16.mxu0 0
        %631 = vmatpush1.bf16.msra.mxu0 0
        %632 = vmatprep.subr.bf16.mxu0 0
        %633 = vmatpush1.bf16.msra.mxu0 0
        %634 = vmatprep.subr.bf16.mxu0 0
        %635 = vmatpush1.bf16.msra.mxu0 0
        %636 = vmatprep.subr.bf16.mxu0 0
        %637 = vmatpush1.bf16.msra.mxu0 0
        %638 = vmatprep.subr.bf16.mxu0 0
        %639 = vmatpush1.bf16.msra.mxu0 0
        %640 = vmatprep.mubr.bf16.mxu0 0
        %641 = vmatmul.mubr.bf16.gmra.mrb[0].mxu0 %v606
        %v642 = vpop.f32.mrb[0].mxu0
        %v643 = vadd.f32 0.0, %v642
        %v644 = vpop.f32.mrb[0].mxu0
        %v645 = vpop.f32.mrb[0].mxu0
        %v646 = vpop.f32.mrb[0].mxu0
        %647 = vdwg.mxu0
        %v648 = vpack.c.bf16 %v643, %v643
        %p649 = scmp.eq.s32.totalorder %s36, 0
        // Predicated region
        $region97: #{tpu_custom_call.1} parent=75 // pred_check
          %p650 = pneg %p649
        $region98: #{tpu_custom_call.1} parent=75 // pred_check_branch
          %652 = sbr.rel (%p650) target = $region100
        $region99: #{tpu_custom_call.1} parent=75 // pred_region
          %v653 = vld [vmem:[%s4] sm:$0xf]
          %v654 = vld [vmem:[%s4 + $0x4] sm:$0xf]
          %v655 = vld [vmem:[%s4 + $0x8] sm:$0xf]
          %v656 = vld [vmem:[%s4 + $0xc] sm:$0xf]
          %v661 = vunpack.c.l.b16 %v653
          %v662 = vunpack.c.l.b16 %v654
          %v663 = vunpack.c.l.b16 %v655
          %v664 = vunpack.c.l.b16 %v656
          %v665 = vpack.c.b16 %v662, %v661
          %v666 = vpack.c.b16 %v664, %v663
          %669 = vmatprep.subr.bf16.mxu0 0
          %670 = vmatpush1.bf16.msra.mxu0 %v665
          %671 = vmatprep.subr.bf16.mxu0 0
          %672 = vmatpush1.bf16.msra.mxu0 %v666
          %673 = vmatprep.subr.bf16.mxu0 0
          %674 = vmatpush1.bf16.msra.mxu0 0
          %675 = vmatprep.subr.bf16.mxu0 0
          %676 = vmatpush1.bf16.msra.mxu0 0
          %677 = vmatprep.subr.bf16.mxu0 0
          %678 = vmatpush1.bf16.msra.mxu0 0
          %679 = vmatprep.subr.bf16.mxu0 0
          %680 = vmatpush1.bf16.msra.mxu0 0
          %681 = vmatprep.subr.bf16.mxu0 0
          %682 = vmatpush1.bf16.msra.mxu0 0
          %683 = vmatprep.subr.bf16.mxu0 0
          %684 = vmatpush1.bf16.msra.mxu0 0
          %685 = vmatprep.subr.bf16.mxu0 0
          %686 = vmatpush1.bf16.msra.mxu0 0
          %687 = vmatprep.subr.bf16.mxu0 0
          %688 = vmatpush1.bf16.msra.mxu0 0
          %689 = vmatprep.subr.bf16.mxu0 0
          %690 = vmatpush1.bf16.msra.mxu0 0
          %691 = vmatprep.subr.bf16.mxu0 0
          %692 = vmatpush1.bf16.msra.mxu0 0
          %693 = vmatprep.subr.bf16.mxu0 0
          %694 = vmatpush1.bf16.msra.mxu0 0
          %695 = vmatprep.subr.bf16.mxu0 0
          %696 = vmatpush1.bf16.msra.mxu0 0
          %697 = vmatprep.subr.bf16.mxu0 0
          %698 = vmatpush1.bf16.msra.mxu0 0
          %699 = vmatprep.subr.bf16.mxu0 0
          %700 = vmatpush1.bf16.msra.mxu0 0
          %701 = vmatprep.mubr.bf16.mxu0 0
          %702 = vmatmul.mubr.bf16.gmra.mrb[0].mxu0 %v606
          %v703 = vpop.f32.mrb[0].mxu0
          %v704 = vadd.f32 0.0, %v703
          %v705 = vpop.f32.mrb[0].mxu0
          %v706 = vpop.f32.mrb[0].mxu0
          %v707 = vpop.f32.mrb[0].mxu0
          %708 = vdwg.mxu0
          %v709 = vpack.c.bf16 %v704, %v704
          %vm710 = vcmask 257024
          %711 = vst.msk [vmem:[#allocation2] sm:$0xf] %vm710, %v709
          %v712 = vld [vmem:[#allocation5] sm:$0xf]
          %v713 = vld [vmem:[#allocation5 + $0x4] sm:$0xf]
          %v714 = vld [vmem:[#allocation5 + $0x8] sm:$0xf]
          %v715 = vld [vmem:[#allocation5 + $0xc] sm:$0xf]
          %v720 = vunpack.c.l.b16 %v712
          %v721 = vunpack.c.l.b16 %v713
          %v722 = vunpack.c.l.b16 %v714
          %v723 = vunpack.c.l.b16 %v715
          %v724 = vpack.c.b16 %v721, %v720
          %v725 = vpack.c.b16 %v723, %v722
          %728 = vmatprep.subr.bf16.mxu0 0
          %729 = vmatpush1.bf16.msra.mxu0 %v724
          %730 = vmatprep.subr.bf16.mxu0 0
          %731 = vmatpush1.bf16.msra.mxu0 %v725
          %732 = vmatprep.subr.bf16.mxu0 0
          %733 = vmatpush1.bf16.msra.mxu0 0
          %734 = vmatprep.subr.bf16.mxu0 0
          %735 = vmatpush1.bf16.msra.mxu0 0
          %736 = vmatprep.subr.bf16.mxu0 0
          %737 = vmatpush1.bf16.msra.mxu0 0
          %738 = vmatprep.subr.bf16.mxu0 0
          %739 = vmatpush1.bf16.msra.mxu0 0
          %740 = vmatprep.subr.bf16.mxu0 0
          %741 = vmatpush1.bf16.msra.mxu0 0
          %742 = vmatprep.subr.bf16.mxu0 0
          %743 = vmatpush1.bf16.msra.mxu0 0
          %744 = vmatprep.subr.bf16.mxu0 0
          %745 = vmatpush1.bf16.msra.mxu0 0
          %746 = vmatprep.subr.bf16.mxu0 0
          %747 = vmatpush1.bf16.msra.mxu0 0
          %748 = vmatprep.subr.bf16.mxu0 0
          %749 = vmatpush1.bf16.msra.mxu0 0
          %750 = vmatprep.subr.bf16.mxu0 0
          %751 = vmatpush1.bf16.msra.mxu0 0
          %752 = vmatprep.subr.bf16.mxu0 0
          %753 = vmatpush1.bf16.msra.mxu0 0
          %754 = vmatprep.subr.bf16.mxu0 0
          %755 = vmatpush1.bf16.msra.mxu0 0
          %756 = vmatprep.subr.bf16.mxu0 0
          %757 = vmatpush1.bf16.msra.mxu0 0
          %758 = vmatprep.subr.bf16.mxu0 0
          %759 = vmatpush1.bf16.msra.mxu0 0
          %760 = vmatprep.mubr.bf16.mxu0 0
          %761 = vmatmul.mubr.bf16.gmra.mrb[0].mxu0 %v606
          %v762 = vpop.f32.mrb[0].mxu0
          %v763 = vadd.f32 0.0, %v762
          %v764 = vpop.f32.mrb[0].mxu0
          %v765 = vpop.f32.mrb[0].mxu0
          %v766 = vpop.f32.mrb[0].mxu0
          %767 = vdwg.mxu0
          %v768 = vpack.c.bf16 %v763, %v763
          %769 = vst.msk [vmem:[#allocation3] sm:$0xf] %vm710, %v768
        $region100: #{tpu_custom_call.1} parent=75 // pred_fallthru
          _
        %v770 = vld [vmem:[#allocation2] sm:$0xf]
        %v771 = vld [vmem:[#allocation3] sm:$0xf]
        %vm772 = vcmask 64512
        %v774 = vsel %vm772, %v648, 0
        %v777 = vsel %vm772, %v770, 0
        %779 = vmatprep.subr.bf16.mxu0 0
        %780 = vmatpush1.bf16.xpose.msra.mxu0 %v777
        %781 = vmatprep.subr.bf16.mxu0 0
        %782 = vmatpush1.bf16.xpose.msra.mxu0 0
        %783 = vmatprep.subr.bf16.mxu0 0
        %784 = vmatpush1.bf16.xpose.msra.mxu0 0
        %785 = vmatprep.subr.bf16.mxu0 0
        %786 = vmatpush1.bf16.xpose.msra.mxu0 0
        %787 = vmatprep.subr.bf16.mxu0 0
        %788 = vmatpush1.bf16.xpose.msra.mxu0 0
        %789 = vmatprep.subr.bf16.mxu0 0
        %790 = vmatpush1.bf16.xpose.msra.mxu0 0
        %791 = vmatprep.subr.bf16.mxu0 0
        %792 = vmatpush1.bf16.xpose.msra.mxu0 0
        %793 = vmatprep.subr.bf16.mxu0 0
        %794 = vmatpush1.bf16.xpose.msra.mxu0 0
        %795 = vmatprep.subr.bf16.mxu0 0
        %796 = vmatpush1.bf16.xpose.msra.mxu0 0
        %797 = vmatprep.subr.bf16.mxu0 0
        %798 = vmatpush1.bf16.xpose.msra.mxu0 0
        %799 = vmatprep.subr.bf16.mxu0 0
        %800 = vmatpush1.bf16.xpose.msra.mxu0 0
        %801 = vmatprep.subr.bf16.mxu0 0
        %802 = vmatpush1.bf16.xpose.msra.mxu0 0
        %803 = vmatprep.subr.bf16.mxu0 0
        %804 = vmatpush1.bf16.xpose.msra.mxu0 0
        %805 = vmatprep.subr.bf16.mxu0 0
        %806 = vmatpush1.bf16.xpose.msra.mxu0 0
        %807 = vmatprep.subr.bf16.mxu0 0
        %808 = vmatpush1.bf16.xpose.msra.mxu0 0
        %809 = vmatprep.subr.bf16.mxu0 0
        %810 = vmatpush1.bf16.xpose.msra.mxu0 0
        %811 = vmatprep.mubr.bf16.mxu0 0
        %812 = vmatmul.mubr.bf16.gmra.mrb[0].mxu0 %v774
        %v813 = vpop.f32.mrb[0].mxu0
        %v814 = vadd.f32 0.0, %v813
        %v815 = vpop.f32.mrb[0].mxu0
        %v816 = vpop.f32.mrb[0].mxu0
        %v817 = vpop.f32.mrb[0].mxu0
        %818 = vdwg.mxu0
        %v819 = vsel %vm772, %v814, -inf
        %820 = vmax.xlane.f32.xlu0 %v819
        %v821 = vpop.xlane.xlu0 %820
        %v822 = vsub.f32 %v814, %v821
        %v823 = vmul.f32 %v822, 1.442695
        %v824 = vpow.pop %v823
        %v825 = vsel %vm772, %v824, 0.0
        %826 = vadd.xlane.f32.xlu0 %v825
        %v827 = vpop.xlane.xlu0 %826
        %v828 = vrcp.pop %v827
        %v829 = vmul.f32 %v824, %v828
        %v830 = vpack.c.bf16 %v829, %v829
        %v832 = vsel %vm772, %v830, 0
        %vm834 = vcmask 1043456
        %v836 = vsel %vm834, %v771, 0
        %838 = vmatprep.subr.bf16.mxu0 0
        %839 = vmatpush1.bf16.msra.mxu0 %v836
        %840 = vmatprep.subr.bf16.mxu0 0
        %841 = vmatpush1.bf16.msra.mxu0 0
        %842 = vmatprep.subr.bf16.mxu0 0
        %843 = vmatpush1.bf16.msra.mxu0 0
        %844 = vmatprep.subr.bf16.mxu0 0
        %845 = vmatpush1.bf16.msra.mxu0 0
        %846 = vmatprep.subr.bf16.mxu0 0
        %847 = vmatpush1.bf16.msra.mxu0 0
        %848 = vmatprep.subr.bf16.mxu0 0
        %849 = vmatpush1.bf16.msra.mxu0 0
        %850 = vmatprep.subr.bf16.mxu0 0
        %851 = vmatpush1.bf16.msra.mxu0 0
        %852 = vmatprep.subr.bf16.mxu0 0
        %853 = vmatpush1.bf16.msra.mxu0 0
        %854 = vmatprep.subr.bf16.mxu0 0
        %855 = vmatpush1.bf16.msra.mxu0 0
        %856 = vmatprep.subr.bf16.mxu0 0
        %857 = vmatpush1.bf16.msra.mxu0 0
        %858 = vmatprep.subr.bf16.mxu0 0
        %859 = vmatpush1.bf16.msra.mxu0 0
        %860 = vmatprep.subr.bf16.mxu0 0
        %861 = vmatpush1.bf16.msra.mxu0 0
        %862 = vmatprep.subr.bf16.mxu0 0
        %863 = vmatpush1.bf16.msra.mxu0 0
        %864 = vmatprep.subr.bf16.mxu0 0
        %865 = vmatpush1.bf16.msra.mxu0 0
        %866 = vmatprep.subr.bf16.mxu0 0
        %867 = vmatpush1.bf16.msra.mxu0 0
        %868 = vmatprep.subr.bf16.mxu0 0
        %869 = vmatpush1.bf16.msra.mxu0 0
        %870 = vmatprep.mubr.bf16.mxu0 0
        %871 = vmatmul.mubr.bf16.gmra.mrb[0].mxu0 %v832
        %v872 = vpop.f32.mrb[0].mxu0
        %v873 = vadd.f32 0.0, %v872
        %v874 = vpop.f32.mrb[0].mxu0
        %v875 = vpop.f32.mrb[0].mxu0
        %v876 = vpop.f32.mrb[0].mxu0
        %877 = vdwg.mxu0
        %879 = vrot.lane.b32.xlu0 %v648, 120
        %v880 = vpop.permute.xlu0 %879
        %v882 = vunpack.c.l.b16 %v770
        %v883 = vpack.c.b16 %v882, %v882
        %884 = vrot.lane.b32.xlu0 %v883, 120
        %v885 = vpop.permute.xlu0 %884
        %v887 = vsel %vm772, %v880, 0
        %v890 = vsel %vm772, %v885, 0
        %892 = vmatprep.subr.bf16.mxu0 0
        %893 = vmatpush1.bf16.xpose.msra.mxu0 %v890
        %894 = vmatprep.subr.bf16.mxu0 0
        %895 = vmatpush1.bf16.xpose.msra.mxu0 0
        %896 = vmatprep.subr.bf16.mxu0 0
        %897 = vmatpush1.bf16.xpose.msra.mxu0 0
        %898 = vmatprep.subr.bf16.mxu0 0
        %899 = vmatpush1.bf16.xpose.msra.mxu0 0
        %900 = vmatprep.subr.bf16.mxu0 0
        %901 = vmatpush1.bf16.xpose.msra.mxu0 0
        %902 = vmatprep.subr.bf16.mxu0 0
        %903 = vmatpush1.bf16.xpose.msra.mxu0 0
        %904 = vmatprep.subr.bf16.mxu0 0
        %905 = vmatpush1.bf16.xpose.msra.mxu0 0
        %906 = vmatprep.subr.bf16.mxu0 0
        %907 = vmatpush1.bf16.xpose.msra.mxu0 0
        %908 = vmatprep.subr.bf16.mxu0 0
        %909 = vmatpush1.bf16.xpose.msra.mxu0 0
        %910 = vmatprep.subr.bf16.mxu0 0
        %911 = vmatpush1.bf16.xpose.msra.mxu0 0
        %912 = vmatprep.subr.bf16.mxu0 0
        %913 = vmatpush1.bf16.xpose.msra.mxu0 0
        %914 = vmatprep.subr.bf16.mxu0 0
        %915 = vmatpush1.bf16.xpose.msra.mxu0 0
        %916 = vmatprep.subr.bf16.mxu0 0
        %917 = vmatpush1.bf16.xpose.msra.mxu0 0
        %918 = vmatprep.subr.bf16.mxu0 0
        %919 = vmatpush1.bf16.xpose.msra.mxu0 0
        %920 = vmatprep.subr.bf16.mxu0 0
        %921 = vmatpush1.bf16.xpose.msra.mxu0 0
        %922 = vmatprep.subr.bf16.mxu0 0
        %923 = vmatpush1.bf16.xpose.msra.mxu0 0
        %924 = vmatprep.mubr.bf16.mxu0 0
        %925 = vmatmul.mubr.bf16.gmra.mrb[0].mxu0 %v887
        %v926 = vpop.f32.mrb[0].mxu0
        %v927 = vadd.f32 0.0, %v926
        %v928 = vpop.f32.mrb[0].mxu0
        %v929 = vpop.f32.mrb[0].mxu0
        %v930 = vpop.f32.mrb[0].mxu0
        %931 = vdwg.mxu0
        %v932 = vsel %vm772, %v927, -inf
        %933 = vmax.xlane.f32.xlu0 %v932
        %v934 = vpop.xlane.xlu0 %933
        %v935 = vsub.f32 %v927, %v934
        %v936 = vmul.f32 %v935, 1.442695
        %v937 = vpow.pop %v936
        %v938 = vsel %vm772, %v937, 0.0
        %939 = vadd.xlane.f32.xlu0 %v938
        %v940 = vpop.xlane.xlu0 %939
        %v941 = vrcp.pop %v940
        %v942 = vmul.f32 %v937, %v941
        %v943 = vpack.c.bf16 %v942, %v942
        %v945 = vunpack.c.l.b16 %v771
        %v946 = vpack.c.b16 %v945, %v945
        %947 = vrot.lane.b32.xlu0 %v946, 120
        %v948 = vpop.permute.xlu0 %947
        %v950 = vsel %vm772, %v943, 0
        %v953 = vsel %vm834, %v948, 0
        %955 = vmatprep.subr.bf16.mxu0 0
        %956 = vmatpush1.bf16.msra.mxu0 %v953
        %957 = vmatprep.subr.bf16.mxu0 0
        %958 = vmatpush1.bf16.msra.mxu0 0
        %959 = vmatprep.subr.bf16.mxu0 0
        %960 = vmatpush1.bf16.msra.mxu0 0
        %961 = vmatprep.subr.bf16.mxu0 0
        %962 = vmatpush1.bf16.msra.mxu0 0
        %963 = vmatprep.subr.bf16.mxu0 0
        %964 = vmatpush1.bf16.msra.mxu0 0
        %965 = vmatprep.subr.bf16.mxu0 0
        %966 = vmatpush1.bf16.msra.mxu0 0
        %967 = vmatprep.subr.bf16.mxu0 0
        %968 = vmatpush1.bf16.msra.mxu0 0
        %969 = vmatprep.subr.bf16.mxu0 0
        %970 = vmatpush1.bf16.msra.mxu0 0
        %971 = vmatprep.subr.bf16.mxu0 0
        %972 = vmatpush1.bf16.msra.mxu0 0
        %973 = vmatprep.subr.bf16.mxu0 0
        %974 = vmatpush1.bf16.msra.mxu0 0
        %975 = vmatprep.subr.bf16.mxu0 0
        %976 = vmatpush1.bf16.msra.mxu0 0
        %977 = vmatprep.subr.bf16.mxu0 0
        %978 = vmatpush1.bf16.msra.mxu0 0
        %979 = vmatprep.subr.bf16.mxu0 0
        %980 = vmatpush1.bf16.msra.mxu0 0
        %981 = vmatprep.subr.bf16.mxu0 0
        %982 = vmatpush1.bf16.msra.mxu0 0
        %983 = vmatprep.subr.bf16.mxu0 0
        %984 = vmatpush1.bf16.msra.mxu0 0
        %985 = vmatprep.subr.bf16.mxu0 0
        %986 = vmatpush1.bf16.msra.mxu0 0
        %987 = vmatprep.mubr.bf16.mxu0 0
        %988 = vmatmul.mubr.bf16.gmra.mrb[0].mxu0 %v950
        %v989 = vpop.f32.mrb[0].mxu0
        %v990 = vadd.f32 0.0, %v989
        %v991 = vpop.f32.mrb[0].mxu0
        %v992 = vpop.f32.mrb[0].mxu0
        %v993 = vpop.f32.mrb[0].mxu0
        %994 = vdwg.mxu0
        %995 = vrot.lane.b32.xlu0 %v648, 112
        %v996 = vpop.permute.xlu0 %995
        %997 = vrot.lane.b32.xlu0 %v883, 112
        %v998 = vpop.permute.xlu0 %997
        %v1000 = vsel %vm772, %v996, 0
        %v1003 = vsel %vm772, %v998, 0
        %1005 = vmatprep.subr.bf16.mxu0 0
        %1006 = vmatpush1.bf16.xpose.msra.mxu0 %v1003
        %1007 = vmatprep.subr.bf16.mxu0 0
        %1008 = vmatpush1.bf16.xpose.msra.mxu0 0
        %1009 = vmatprep.subr.bf16.mxu0 0
        %1010 = vmatpush1.bf16.xpose.msra.mxu0 0
        %1011 = vmatprep.subr.bf16.mxu0 0
        %1012 = vmatpush1.bf16.xpose.msra.mxu0 0
        %1013 = vmatprep.subr.bf16.mxu0 0
        %1014 = vmatpush1.bf16.xpose.msra.mxu0 0
        %1015 = vmatprep.subr.bf16.mxu0 0
        %1016 = vmatpush1.bf16.xpose.msra.mxu0 0
        %1017 = vmatprep.subr.bf16.mxu0 0
        %1018 = vmatpush1.bf16.xpose.msra.mxu0 0
        %1019 = vmatprep.subr.bf16.mxu0 0
        %1020 = vmatpush1.bf16.xpose.msra.mxu0 0
        %1021 = vmatprep.subr.bf16.mxu0 0
        %1022 = vmatpush1.bf16.xpose.msra.mxu0 0
        %1023 = vmatprep.subr.bf16.mxu0 0
        %1024 = vmatpush1.bf16.xpose.msra.mxu0 0
        %1025 = vmatprep.subr.bf16.mxu0 0
        %1026 = vmatpush1.bf16.xpose.msra.mxu0 0
        %1027 = vmatprep.subr.bf16.mxu0 0
        %1028 = vmatpush1.bf16.xpose.msra.mxu0 0
        %1029 = vmatprep.subr.bf16.mxu0 0
        %1030 = vmatpush1.bf16.xpose.msra.mxu0 0
        %1031 = vmatprep.subr.bf16.mxu0 0
        %1032 = vmatpush1.bf16.xpose.msra.mxu0 0
        %1033 = vmatprep.subr.bf16.mxu0 0
        %1034 = vmatpush1.bf16.xpose.msra.mxu0 0
        %1035 = vmatprep.subr.bf16.mxu0 0
        %1036 = vmatpush1.bf16.xpose.msra.mxu0 0
        %1037 = vmatprep.mubr.bf16.mxu0 0
        %1038 = vmatmul.mubr.bf16.gmra.mrb[0].mxu0 %v1000
        %v1039 = vpop.f32.mrb[0].mxu0
        %v1040 = vadd.f32 0.0, %v1039
        %v1041 = vpop.f32.mrb[0].mxu0
        %v1042 = vpop.f32.mrb[0].mxu0
        %v1043 = vpop.f32.mrb[0].mxu0
        %1044 = vdwg.mxu0
        %v1045 = vsel %vm772, %v1040, -inf
        %1046 = vmax.xlane.f32.xlu0 %v1045
        %v1047 = vpop.xlane.xlu0 %1046
        %v1048 = vsub.f32 %v1040, %v1047
        %v1049 = vmul.f32 %v1048, 1.442695
        %v1050 = vpow.pop %v1049
        %v1051 = vsel %vm772, %v1050, 0.0
        %1052 = vadd.xlane.f32.xlu0 %v1051
        %v1053 = vpop.xlane.xlu0 %1052
        %v1054 = vrcp.pop %v1053
        %v1055 = vmul.f32 %v1050, %v1054
        %v1056 = vpack.c.bf16 %v1055, %v1055
        %1057 = vrot.lane.b32.xlu0 %v946, 112
        %v1058 = vpop.permute.xlu0 %1057
        %v1060 = vsel %vm772, %v1056, 0
        %v1063 = vsel %vm834, %v1058, 0
        %1065 = vmatprep.subr.bf16.mxu0 0
        %1066 = vmatpush1.bf16.msra.mxu0 %v1063
        %1067 = vmatprep.subr.bf16.mxu0 0
        %1068 = vmatpush1.bf16.msra.mxu0 0
        %1069 = vmatprep.subr.bf16.mxu0 0
        %1070 = vmatpush1.bf16.msra.mxu0 0
        %1071 = vmatprep.subr.bf16.mxu0 0
        %1072 = vmatpush1.bf16.msra.mxu0 0
        %1073 = vmatprep.subr.bf16.mxu0 0
        %1074 = vmatpush1.bf16.msra.mxu0 0
        %1075 = vmatprep.subr.bf16.mxu0 0
        %1076 = vmatpush1.bf16.msra.mxu0 0
        %1077 = vmatprep.subr.bf16.mxu0 0
        %1078 = vmatpush1.bf16.msra.mxu0 0
        %1079 = vmatprep.subr.bf16.mxu0 0
        %1080 = vmatpush1.bf16.msra.mxu0 0
        %1081 = vmatprep.subr.bf16.mxu0 0
        %1082 = vmatpush1.bf16.msra.mxu0 0
        %1083 = vmatprep.subr.bf16.mxu0 0
        %1084 = vmatpush1.bf16.msra.mxu0 0
        %1085 = vmatprep.subr.bf16.mxu0 0
        %1086 = vmatpush1.bf16.msra.mxu0 0
        %1087 = vmatprep.subr.bf16.mxu0 0
        %1088 = vmatpush1.bf16.msra.mxu0 0
        %1089 = vmatprep.subr.bf16.mxu0 0
        %1090 = vmatpush1.bf16.msra.mxu0 0
        %1091 = vmatprep.subr.bf16.mxu0 0
        %1092 = vmatpush1.bf16.msra.mxu0 0
        %1093 = vmatprep.subr.bf16.mxu0 0
        %1094 = vmatpush1.bf16.msra.mxu0 0
        %1095 = vmatprep.subr.bf16.mxu0 0
        %1096 = vmatpush1.bf16.msra.mxu0 0
        %1097 = vmatprep.mubr.bf16.mxu0 0
        %1098 = vmatmul.mubr.bf16.gmra.mrb[0].mxu0 %v1060
        %v1099 = vpop.f32.mrb[0].mxu0
        %v1100 = vadd.f32 0.0, %v1099
        %v1101 = vpop.f32.mrb[0].mxu0
        %v1102 = vpop.f32.mrb[0].mxu0
        %v1103 = vpop.f32.mrb[0].mxu0
        %1104 = vdwg.mxu0
        %1105 = vrot.lane.b32.xlu0 %v648, 104
        %v1106 = vpop.permute.xlu0 %1105
        %1107 = vrot.lane.b32.xlu0 %v883, 104
        %v1108 = vpop.permute.xlu0 %1107
        %v1110 = vsel %vm772, %v1106, 0
        %v1113 = vsel %vm772, %v1108, 0
        %1115 = vmatprep.subr.bf16.mxu0 0
        %1116 = vmatpush1.bf16.xpose.msra.mxu0 %v1113
        %1117 = vmatprep.subr.bf16.mxu0 0
        %1118 = vmatpush1.bf16.xpose.msra.mxu0 0
        %1119 = vmatprep.subr.bf16.mxu0 0
        %1120 = vmatpush1.bf16.xpose.msra.mxu0 0
        %1121 = vmatprep.subr.bf16.mxu0 0
        %1122 = vmatpush1.bf16.xpose.msra.mxu0 0
        %1123 = vmatprep.subr.bf16.mxu0 0
        %1124 = vmatpush1.bf16.xpose.msra.mxu0 0
        %1125 = vmatprep.subr.bf16.mxu0 0
        %1126 = vmatpush1.bf16.xpose.msra.mxu0 0
        %1127 = vmatprep.subr.bf16.mxu0 0
        %1128 = vmatpush1.bf16.xpose.msra.mxu0 0
        %1129 = vmatprep.subr.bf16.mxu0 0
        %1130 = vmatpush1.bf16.xpose.msra.mxu0 0
        %1131 = vmatprep.subr.bf16.mxu0 0
        %1132 = vmatpush1.bf16.xpose.msra.mxu0 0
        %1133 = vmatprep.subr.bf16.mxu0 0
        %1134 = vmatpush1.bf16.xpose.msra.mxu0 0
        %1135 = vmatprep.subr.bf16.mxu0 0
        %1136 = vmatpush1.bf16.xpose.msra.mxu0 0
        %1137 = vmatprep.subr.bf16.mxu0 0
        %1138 = vmatpush1.bf16.xpose.msra.mxu0 0
        %1139 = vmatprep.subr.bf16.mxu0 0
        %1140 = vmatpush1.bf16.xpose.msra.mxu0 0
        %1141 = vmatprep.subr.bf16.mxu0 0
        %1142 = vmatpush1.bf16.xpose.msra.mxu0 0
        %1143 = vmatprep.subr.bf16.mxu0 0
        %1144 = vmatpush1.bf16.xpose.msra.mxu0 0
        %1145 = vmatprep.subr.bf16.mxu0 0
        %1146 = vmatpush1.bf16.xpose.msra.mxu0 0
        %1147 = vmatprep.mubr.bf16.mxu0 0
        %1148 = vmatmul.mubr.bf16.gmra.mrb[0].mxu0 %v1110
        %v1149 = vpop.f32.mrb[0].mxu0
        %v1150 = vadd.f32 0.0, %v1149
        %v1151 = vpop.f32.mrb[0].mxu0
        %v1152 = vpop.f32.mrb[0].mxu0
        %v1153 = vpop.f32.mrb[0].mxu0
        %1154 = vdwg.mxu0
        %v1155 = vsel %vm772, %v1150, -inf
        %1156 = vmax.xlane.f32.xlu0 %v1155
        %v1157 = vpop.xlane.xlu0 %1156
        %v1158 = vsub.f32 %v1150, %v1157
        %v1159 = vmul.f32 %v1158, 1.442695
        %v1160 = vpow.pop %v1159
        %v1161 = vsel %vm772, %v1160, 0.0
        %1162 = vadd.xlane.f32.xlu0 %v1161
        %v1163 = vpop.xlane.xlu0 %1162
        %v1164 = vrcp.pop %v1163
        %v1165 = vmul.f32 %v1160, %v1164
        %v1166 = vpack.c.bf16 %v1165, %v1165
        %1167 = vrot.lane.b32.xlu0 %v946, 104
        %v1168 = vpop.permute.xlu0 %1167
        %v1170 = vsel %vm772, %v1166, 0
        %v1173 = vsel %vm834, %v1168, 0
        %1175 = vmatprep.subr.bf16.mxu0 0
        %1176 = vmatpush1.bf16.msra.mxu0 %v1173
        %1177 = vmatprep.subr.bf16.mxu0 0
        %1178 = vmatpush1.bf16.msra.mxu0 0
        %1179 = vmatprep.subr.bf16.mxu0 0
        %1180 = vmatpush1.bf16.msra.mxu0 0
        %1181 = vmatprep.subr.bf16.mxu0 0
        %1182 = vmatpush1.bf16.msra.mxu0 0
        %1183 = vmatprep.subr.bf16.mxu0 0
        %1184 = vmatpush1.bf16.msra.mxu0 0
        %1185 = vmatprep.subr.bf16.mxu0 0
        %1186 = vmatpush1.bf16.msra.mxu0 0
        %1187 = vmatprep.subr.bf16.mxu0 0
        %1188 = vmatpush1.bf16.msra.mxu0 0
        %1189 = vmatprep.subr.bf16.mxu0 0
        %1190 = vmatpush1.bf16.msra.mxu0 0
        %1191 = vmatprep.subr.bf16.mxu0 0
        %1192 = vmatpush1.bf16.msra.mxu0 0
        %1193 = vmatprep.subr.bf16.mxu0 0
        %1194 = vmatpush1.bf16.msra.mxu0 0
        %1195 = vmatprep.subr.bf16.mxu0 0
        %1196 = vmatpush1.bf16.msra.mxu0 0
        %1197 = vmatprep.subr.bf16.mxu0 0
        %1198 = vmatpush1.bf16.msra.mxu0 0
        %1199 = vmatprep.subr.bf16.mxu0 0
        %1200 = vmatpush1.bf16.msra.mxu0 0
        %1201 = vmatprep.subr.bf16.mxu0 0
        %1202 = vmatpush1.bf16.msra.mxu0 0
        %1203 = vmatprep.subr.bf16.mxu0 0
        %1204 = vmatpush1.bf16.msra.mxu0 0
        %1205 = vmatprep.subr.bf16.mxu0 0
        %1206 = vmatpush1.bf16.msra.mxu0 0
        %1207 = vmatprep.mubr.bf16.mxu0 0
        %1208 = vmatmul.mubr.bf16.gmra.mrb[0].mxu0 %v1170
        %v1209 = vpop.f32.mrb[0].mxu0
        %v1210 = vadd.f32 0.0, %v1209
        %v1211 = vpop.f32.mrb[0].mxu0
        %v1212 = vpop.f32.mrb[0].mxu0
        %v1213 = vpop.f32.mrb[0].mxu0
        %1214 = vdwg.mxu0
        %1216 = vrot.lane.b32.xlu0 %v990, 8
        %v1217 = vpop.permute.xlu0 %1216
        %1220 = vrot.lane.b32.xlu0 %v1100, 16
        %v1221 = vpop.permute.xlu0 %1220
        %1224 = vrot.lane.b32.xlu0 %v1210, 24
        %v1225 = vpop.permute.xlu0 %1224
        %v1227 = vsel %vm772, %v873, %v1217
        %vm1228 = vcmask 130048
        %v1229 = vsel %vm1228, %v1227, %v1221
        %vm1230 = vcmask 195584
        %v1231 = vsel %vm1230, %v1229, %v1225
        %v1232 = vpack.c.bf16 %v1231, %v1231
        %vm1233 = vcmask 257024
        %1234 = vst.msk [vmem:[#allocation4] sm:$0xf] %vm1233, %v1232
        %v1235 = vld [vmem:[#allocation4] sm:$0xf]
        %v1236 = vld [vmem:[#allocation8] sm:$0xf]
        %v1237 = vld [vmem:[#allocation8 + $0x4] sm:$0xf]
        %v1238 = vld [vmem:[#allocation8 + $0x8] sm:$0xf]
        %v1239 = vld [vmem:[#allocation8 + $0xc] sm:$0xf]
        %v1240 = vld [vmem:[#allocation10] sm:$0x1]
        %v1242 = vlaneseq
        %v1243 = vshrl.u32 %v1242, 7
        %v1244 = vsub.s32 0, %v1243
        %v1245 = vrot.slane %v1240, %v1244
        %v1251 = vunpack.c.l.b16 %v1236
        %v1252 = vunpack.c.l.b16 %v1237
        %v1253 = vunpack.c.l.b16 %v1238
        %v1254 = vunpack.c.l.b16 %v1239
        %v1255 = vpack.c.b16 %v1252, %v1251
        %v1256 = vpack.c.b16 %v1254, %v1253
        %v1260 = vsel %vm559, %v1235, 0
        %1262 = vmatprep.subr.bf16.mxu0 0
        %1263 = vmatpush1.bf16.msra.mxu0 %v1255
        %1264 = vmatprep.subr.bf16.mxu0 0
        %1265 = vmatpush1.bf16.msra.mxu0 %v1256
        %1266 = vmatprep.subr.bf16.mxu0 0
        %1267 = vmatpush1.bf16.msra.mxu0 0
        %1268 = vmatprep.subr.bf16.mxu0 0
        %1269 = vmatpush1.bf16.msra.mxu0 0
        %1270 = vmatprep.subr.bf16.mxu0 0
        %1271 = vmatpush1.bf16.msra.mxu0 0
        %1272 = vmatprep.subr.bf16.mxu0 0
        %1273 = vmatpush1.bf16.msra.mxu0 0
        %1274 = vmatprep.subr.bf16.mxu0 0
        %1275 = vmatpush1.bf16.msra.mxu0 0
        %1276 = vmatprep.subr.bf16.mxu0 0
        %1277 = vmatpush1.bf16.msra.mxu0 0
        %1278 = vmatprep.subr.bf16.mxu0 0
        %1279 = vmatpush1.bf16.msra.mxu0 0
        %1280 = vmatprep.subr.bf16.mxu0 0
        %1281 = vmatpush1.bf16.msra.mxu0 0
        %1282 = vmatprep.subr.bf16.mxu0 0
        %1283 = vmatpush1.bf16.msra.mxu0 0
        %1284 = vmatprep.subr.bf16.mxu0 0
        %1285 = vmatpush1.bf16.msra.mxu0 0
        %1286 = vmatprep.subr.bf16.mxu0 0
        %1287 = vmatpush1.bf16.msra.mxu0 0
        %1288 = vmatprep.subr.bf16.mxu0 0
        %1289 = vmatpush1.bf16.msra.mxu0 0
        %1290 = vmatprep.subr.bf16.mxu0 0
        %1291 = vmatpush1.bf16.msra.mxu0 0
        %1292 = vmatprep.subr.bf16.mxu0 0
        %1293 = vmatpush1.bf16.msra.mxu0 0
        %1294 = vmatprep.mubr.bf16.mxu0 0
        %1295 = vmatmul.mubr.bf16.gmra.mrb[0].mxu0 %v1260
        %v1296 = vpop.f32.mrb[0].mxu0
        %v1297 = vadd.f32 %v1245, %v1296
        %v1298 = vpop.f32.mrb[0].mxu0
        %v1299 = vpop.f32.mrb[0].mxu0
        %v1300 = vpop.f32.mrb[0].mxu0
        %1301 = vdwg.mxu0
        %v1302 = vadd.f32 %v1297, %v556
        %v1303 = vld [vmem:[#allocation11] sm:$0x1]
        %v1304 = vld [vmem:[#allocation13] sm:$0x1]
        %v1305 = vsel %vm559, %v1302, 0.0
        %1306 = vadd.xlane.f32.xlu0 %v1305
        %v1307 = vpop.xlane.xlu0 %1306
        %v1308 = vmul.f32 %v1307, %v563
        %v1309 = vsub.f32 %v1302, %v1308
        %v1310 = vmul.f32 %v1309, %v1309
        %v1311 = vsel %vm559, %v1310, 0.0
        %1312 = vadd.xlane.f32.xlu0 %v1311
        %v1313 = vpop.xlane.xlu0 %1312
        %v1314 = vmul.f32 %v1313, %v563
        %v1315 = vadd.f32 %v1314, 1e-05
        %v1316 = vrsqrt.pop %v1315
        %v1317 = vmul.f32 %v1309, %v1316
        %v1319 = vlaneseq
        %v1320 = vshrl.u32 %v1319, 7
        %v1321 = vsub.s32 0, %v1320
        %v1322 = vrot.slane %v1303, %v1321
        %v1324 = vmul.f32 %v1317, %v1322
        %v1326 = vlaneseq
        %v1327 = vshrl.u32 %v1326, 7
        %v1328 = vsub.s32 0, %v1327
        %v1329 = vrot.slane %v1304, %v1328
        %v1331 = vadd.f32 %v1324, %v1329
        %v1332 = vpack.c.bf16 %v1331, %v1331
        %v1333 = vld [vmem:[%s13] sm:$0x1]
        %v1335 = vlaneseq
        %v1336 = vshrl.u32 %v1335, 7
        %v1337 = vsub.s32 0, %v1336
        %v1338 = vrot.slane %v1333, %v1337
        %v1340 = vadd.f32 %v1302, %v1338
        %v1341 = vld [vmem:[%s10] sm:$0xf]
        %v1342 = vld [vmem:[%s10 + $0x4] sm:$0xf]
        %v1343 = vld [vmem:[%s10 + $0x8] sm:$0xf]
        %v1344 = vld [vmem:[%s10 + $0xc] sm:$0xf]
        %v1345 = vld [vmem:[%s11] sm:$0x1]
        %v1347 = vlaneseq
        %v1348 = vshrl.u32 %v1347, 7
        %v1349 = vsub.s32 0, %v1348
        %v1350 = vrot.slane %v1345, %v1349
        %v1356 = vunpack.c.l.b16 %v1341
        %v1357 = vunpack.c.l.b16 %v1342
        %v1358 = vunpack.c.l.b16 %v1343
        %v1359 = vunpack.c.l.b16 %v1344
        %v1360 = vpack.c.b16 %v1357, %v1356
        %v1361 = vpack.c.b16 %v1359, %v1358
        %v1365 = vsel %vm559, %v1332, 0
        %1367 = vmatprep.subr.bf16.mxu0 0
        %1368 = vmatpush1.bf16.msra.mxu0 %v1360
        %1369 = vmatprep.subr.bf16.mxu0 0
        %1370 = vmatpush1.bf16.msra.mxu0 %v1361
        %1371 = vmatprep.subr.bf16.mxu0 0
        %1372 = vmatpush1.bf16.msra.mxu0 0
        %1373 = vmatprep.subr.bf16.mxu0 0
        %1374 = vmatpush1.bf16.msra.mxu0 0
        %1375 = vmatprep.subr.bf16.mxu0 0
        %1376 = vmatpush1.bf16.msra.mxu0 0
        %1377 = vmatprep.subr.bf16.mxu0 0
        %1378 = vmatpush1.bf16.msra.mxu0 0
        %1379 = vmatprep.subr.bf16.mxu0 0
        %1380 = vmatpush1.bf16.msra.mxu0 0
        %1381 = vmatprep.subr.bf16.mxu0 0
        %1382 = vmatpush1.bf16.msra.mxu0 0
        %1383 = vmatprep.subr.bf16.mxu0 0
        %1384 = vmatpush1.bf16.msra.mxu0 0
        %1385 = vmatprep.subr.bf16.mxu0 0
        %1386 = vmatpush1.bf16.msra.mxu0 0
        %1387 = vmatprep.subr.bf16.mxu0 0
        %1388 = vmatpush1.bf16.msra.mxu0 0
        %1389 = vmatprep.subr.bf16.mxu0 0
        %1390 = vmatpush1.bf16.msra.mxu0 0
        %1391 = vmatprep.subr.bf16.mxu0 0
        %1392 = vmatpush1.bf16.msra.mxu0 0
        %1393 = vmatprep.subr.bf16.mxu0 0
        %1394 = vmatpush1.bf16.msra.mxu0 0
        %1395 = vmatprep.subr.bf16.mxu0 0
        %1396 = vmatpush1.bf16.msra.mxu0 0
        %1397 = vmatprep.subr.bf16.mxu0 0
        %1398 = vmatpush1.bf16.msra.mxu0 0
        %1399 = vmatprep.mubr.bf16.mxu0 0
        %1400 = vmatmul.mubr.bf16.gmra.mrb[0].mxu0 %v1365
        %v1401 = vpop.f32.mrb[0].mxu0
        %v1402 = vadd.f32 %v1350, %v1401
        %v1403 = vpop.f32.mrb[0].mxu0
        %v1404 = vpop.f32.mrb[0].mxu0
        %v1405 = vpop.f32.mrb[0].mxu0
        %1406 = vdwg.mxu0
        %v1407 = vmul.f32 %v1402, 0.5
        %v1408 = vrcp.pop 1.4142135
        %v1409 = vmul.f32 %v1402, %v1408
        %v1410 = verf.f32.pop %v1409
        %v1411 = vadd.f32 %v1410, 1.0
        %v1412 = vmul.f32 %v1407, %v1411
        %v1413 = vpack.c.bf16 %v1412, %v1412
        %v1414 = vld [vmem:[%s12] sm:$0xf]
        %v1415 = vld [vmem:[%s12 + $0x4] sm:$0xf]
        %v1416 = vld [vmem:[%s12 + $0x8] sm:$0xf]
        %v1417 = vld [vmem:[%s12 + $0xc] sm:$0xf]
        %v1418 = vld [vmem:[%s12 + $0x10] sm:$0xf]
        %v1419 = vld [vmem:[%s12 + $0x14] sm:$0xf]
        %v1420 = vld [vmem:[%s12 + $0x18] sm:$0xf]
        %v1421 = vld [vmem:[%s12 + $0x1c] sm:$0xf]
        %v1430 = vunpack.c.l.b16 %v1414
        %v1431 = vunpack.c.l.b16 %v1415
        %v1432 = vunpack.c.l.b16 %v1416
        %v1433 = vunpack.c.l.b16 %v1417
        %v1434 = vunpack.c.l.b16 %v1418
        %v1435 = vunpack.c.l.b16 %v1419
        %v1436 = vunpack.c.l.b16 %v1420
        %v1437 = vunpack.c.l.b16 %v1421
        %v1438 = vpack.c.b16 %v1431, %v1430
        %v1439 = vpack.c.b16 %v1433, %v1432
        %v1440 = vpack.c.b16 %v1435, %v1434
        %v1441 = vpack.c.b16 %v1437, %v1436
        %vm1446 = vcmask 523264
        %v1448 = vsel %vm1446, %v1413, 0
        %1450 = vmatprep.subr.bf16.mxu0 0
        %1451 = vmatpush1.bf16.msra.mxu0 %v1438
        %1452 = vmatprep.subr.bf16.mxu0 0
        %1453 = vmatpush1.bf16.msra.mxu0 %v1439
        %1454 = vmatprep.subr.bf16.mxu0 0
        %1455 = vmatpush1.bf16.msra.mxu0 %v1440
        %1456 = vmatprep.subr.bf16.mxu0 0
        %1457 = vmatpush1.bf16.msra.mxu0 %v1441
        %1458 = vmatprep.subr.bf16.mxu0 0
        %1459 = vmatpush1.bf16.msra.mxu0 0
        %1460 = vmatprep.subr.bf16.mxu0 0
        %1461 = vmatpush1.bf16.msra.mxu0 0
        %1462 = vmatprep.subr.bf16.mxu0 0
        %1463 = vmatpush1.bf16.msra.mxu0 0
        %1464 = vmatprep.subr.bf16.mxu0 0
        %1465 = vmatpush1.bf16.msra.mxu0 0
        %1466 = vmatprep.subr.bf16.mxu0 0
        %1467 = vmatpush1.bf16.msra.mxu0 0
        %1468 = vmatprep.subr.bf16.mxu0 0
        %1469 = vmatpush1.bf16.msra.mxu0 0
        %1470 = vmatprep.subr.bf16.mxu0 0
        %1471 = vmatpush1.bf16.msra.mxu0 0
        %1472 = vmatprep.subr.bf16.mxu0 0
        %1473 = vmatpush1.bf16.msra.mxu0 0
        %1474 = vmatprep.subr.bf16.mxu0 0
        %1475 = vmatpush1.bf16.msra.mxu0 0
        %1476 = vmatprep.subr.bf16.mxu0 0
        %1477 = vmatpush1.bf16.msra.mxu0 0
        %1478 = vmatprep.subr.bf16.mxu0 0
        %1479 = vmatpush1.bf16.msra.mxu0 0
        %1480 = vmatprep.subr.bf16.mxu0 0
        %1481 = vmatpush1.bf16.msra.mxu0 0
        %1482 = vmatprep.mubr.bf16.mxu0 0
        %1483 = vmatmul.mubr.bf16.gmra.mrb[0].mxu0 %v1448
        %v1484 = vpop.f32.mrb[0].mxu0
        %v1485 = vadd.f32 0.0, %v1484
        %v1486 = vpop.f32.mrb[0].mxu0
        %v1487 = vpop.f32.mrb[0].mxu0
        %v1488 = vpop.f32.mrb[0].mxu0
        %1489 = vdwg.mxu0
        %v1490 = vadd.f32 %v1340, %v1485
        %1491 = vst.msk [vmem:[%s547] sm:$0xff] %vm559, %v1490
        %s1492 = sand.u32 %s354, 1
        %s1493 = scalar_lea.sflag [#allocation7], %s1492
        %s1494 = sand.u32 %s354, 1
        %s1495 = smul.addr %s1494, 8
        %s1496 = scalar_lea.vmem [#allocation14], %s1495
        // Predicated region
        $region101: #{tpu_custom_call.1} parent=75 // pred_check
          %p1497 = pneg %p364
        $region102: #{tpu_custom_call.1} parent=75 // pred_check_branch
          %1499 = sbr.rel (%p1497) target = $region104
        $region103: #{tpu_custom_call.1} parent=75 // pred_region
          %s1501 = ssub.s32 128, 128
          %1502 = vsyncadd %s1493, %s1501
          %s1503 = sadd.s32 %s36, %s35
          %s1504 = smul.addr %s1503, 128
          %s1505 = scalar_lea.hbm %s14, %s1504
          %s1507 = sshll.u32 %s1496, 4
          %s1508 = int_to_ptr.vmem [resolvable:$true] %s1507
          %1510 = dma.vmem_to_hbm [thread:$0]  %s1508, 128, %s1505, %s1493
        $region104: #{tpu_custom_call.1} parent=75 // pred_fallthru
          _
      $region76: #{tpu_custom_call.1} parent=5 // pred_fallthru
        _
      %p1511 = scmp.le.s32.totalorder 2, %s26
      // Predicated region
      $region105: #{tpu_custom_call.1} parent=5 // pred_check
        %p1512 = pneg %p1511
      $region106: #{tpu_custom_call.1} parent=5 // pred_check_branch
        %1514 = sbr.rel (%p1512) target = $region108
      $region107: #{tpu_custom_call.1} parent=5 // pred_region
        %s1515 = ssub.s32 %s26, 2
        // Predicated region
        $region109: #{tpu_custom_call.1} parent=107 // pred_check
          %p1516 = pneg %p370
        $region110: #{tpu_custom_call.1} parent=107 // pred_check_branch
          %1518 = sbr.rel (%p1516) target = $region112
        $region111: #{tpu_custom_call.1} parent=107 // pred_region
          %s1519 = sand.u32 %s355, 1
          %s1520 = scalar_lea.sflag [#allocation7], %s1519
          %s1521 = sand.u32 %s355, 1
          %s1522 = smul.addr %s1521, 8
          %s1523 = scalar_lea.vmem [#allocation14], %s1522
          %1524 = dma.done %s1520, 128
        $region112: #{tpu_custom_call.1} parent=107 // pred_fallthru
          _
      $region108: #{tpu_custom_call.1} parent=5 // pred_fallthru
        _
    $region6: #{tpu_custom_call.1} parent=1 // loop_footer
      %s30 = sadd.s32 1, %s26
    $region7: #{tpu_custom_call.1} parent=1 // loop_footer_branch
      %25 = sbr.rel target = $region3
    $region8: #{tpu_custom_call.1} parent=1 // loop_exit
      _
    %1525 = vsyncpa [#allocation6], 1
    %s1526 = scalar_lea.sflag [#allocation6], 1
    %1527 = vsyncpa %s1526, 1
    %1528 = vsyncpa [#allocation9], 1
    %1529 = vsyncpa [#allocation12], 1
    %1530 = vsyncpa [#allocation7], 1
    %s1531 = scalar_lea.sflag [#allocation7], 1
    %1532 = vsyncpa %s1531, 1

</llo_original>
